<compile_context>
chip_gen: v7x
topology: tpu7x:2x2x1
jax: 0.10.0
libtpu: 0.0.40
codegen_flags: <defaults>
</compile_context>

<pallas_src>
from functools import partial

import numpy as np

import jax
import jax.numpy as jnp
from jax.experimental import pallas as pl
from jax.experimental.pallas import tpu as pltpu


def _uppredict_kernel(x_ref, wph_ref, bns_ref, mask_ref, scat_ref, o_ref, *,
                      alpha, n_batch, cin, cout, h, w):
    # x_ref   : (N, Cin, h*w)      original-resolution input, both images
    # wph_ref : (4*Cout, 9*Cin)    phase-folded conv weights (upsample folded in)
    # bns_ref : (4*Cout, 3)        packed [bias, bn_scale, bn_shift] per row
    # mask_ref: (9, h*w)           per-tap SAME-padding validity mask (0/1 f32)
    # scat_ref: (4, h*w, H*W)      per-phase one-hot scatter to output lanes
    # o_ref   : (N, Cout, H*W)     lane-dense output (H*W on the lane axis)
    hw = h * w
    MARGIN = 16                    # >= max |flattened tap offset| = w + 1 = 9

    wph = wph_ref[...]             # (4*Cout, 9*Cin)
    bns = bns_ref[...]             # (4*Cout, 3)
    masks = mask_ref[...]          # (9, h*w)
    zeros_m = jnp.zeros((cin, MARGIN), jnp.float32)

    for n in range(n_batch):       # static unroll (N=2), single grid step
        x = x_ref[n]                                          # (Cin, h*w)
        xpad = jnp.concatenate([zeros_m, x, zeros_m], axis=1)  # (Cin, hw+2*MARGIN)

        # ---- im2col at the ORIGINAL resolution: 9 shifted+masked value slices
        taps = []
        for t in range(9):
            ry, rx = t // 3 - 1, t % 3 - 1
            off = ry * w + rx
            tap = xpad[:, MARGIN + off:MARGIN + off + hw]     # (Cin, h*w)
            taps.append(tap * masks[t:t + 1, :])              # zero-pad via mask
        patch = jnp.concatenate(taps, axis=0)                 # (9*Cin, h*w)

        # ---- all 4 phases' pre-activations in ONE MXU matmul -----------------
        r = jnp.dot(wph, patch,
                    preferred_element_type=jnp.float32)       # (4*Cout, h*w)
        r = r + bns[:, 0:1]                                   # conv bias
        r = jnp.where(r >= 0, r, alpha * r)                   # LeakyReLU(alpha)
        r = r * bns[:, 1:2] + bns[:, 2:3]                     # BatchNorm2d (eval)

        # ---- interleave phases into lane-dense (Cout, H*W) via MXU scatter ---
        out = jnp.dot(r[0:cout, :], scat_ref[0],
                      preferred_element_type=jnp.float32)     # (Cout, H*W)
        for f in range(1, 4):
            out = out + jnp.dot(r[f * cout:(f + 1) * cout, :], scat_ref[f],
                                preferred_element_type=jnp.float32)
        o_ref[n] = out.astype(o_ref.dtype)


def up_predict(x_nchw, params, *, scale=2, alpha=0.1, eps=1e-5):
    assert scale == 2, "phase decomposition below is specialized to scale=2"
    w = params["w"]                      # (3, 3, Cin, Cout) HWIO
    b = params["b"]                      # (Cout,)
    gamma, beta = params["gamma"], params["beta"]
    rmean, rvar = params["running_mean"], params["running_var"]

    N, cin, h, w_sp = x_nchw.shape
    cout = w.shape[3]
    H, W = h * scale, w_sp * scale
    hw, HW = h * w_sp, H * W

    # ---- weight-side prep (tiny, trace-time; activations untouched by XLA) --
    # Phase folding: output pixel (2y+py, 2x+px) of (upsample -> conv SAME)
    # is a conv of the ORIGINAL input with source offsets
    # ry = floor((py+ky-1)/2), rx = floor((px+kx-1)/2); original taps mapping
    # to the same (ry,rx) are summed.  A[p,k,r] selects r = ry+1 for (p,k).
    A = np.zeros((2, 3, 3), np.float32)
    for p in range(2):
        for k in range(3):
            A[p, k, (p + k - 1) // 2 + 1] = 1.0
    wph_rows = []
    for py in range(2):
        for px in range(2):
            pw = jnp.einsum("klio,kr,ls->rsio", w, A[py], A[px])  # (3,3,Cin,Cout)
            wph_rows.append(jnp.transpose(pw, (3, 0, 1, 2)).reshape(cout, 9 * cin))
    wph = jnp.concatenate(wph_rows, axis=0)                       # (4*Cout, 9*Cin)

    bn_scale = gamma / jnp.sqrt(rvar + eps)
    bn_shift = beta - rmean * bn_scale
    bns = jnp.tile(jnp.stack([b, bn_scale, bn_shift], axis=1), (4, 1))  # (4*Cout,3)

    # Per-tap validity mask: SAME zero padding at the original resolution
    # (also kills the flattened horizontal / cross-image wrap of the slices).
    mask = np.zeros((9, hw), np.float32)
    for t in range(9):
        ry, rx = t // 3 - 1, t % 3 - 1
        for y in range(h):
            for x in range(w_sp):
                if 0 <= y + ry < h and 0 <= x + rx < w_sp:
                    mask[t, y * w_sp + x] = 1.0

    # Per-phase one-hot scatter: original q = y*w+x  ->  output p = Y*W+X.
    scat = np.zeros((4, hw, HW), np.float32)
    for py in range(2):
        for px in range(2):
            f = py * 2 + px
            for y in range(h):
                for x in range(w_sp):
                    scat[f, y * w_sp + x, (2 * y + py) * W + (2 * x + px)] = 1.0

    # free metadata reshape: NCHW (N,Cin,h,w) -> (N, Cin, h*w)
    x_flat = x_nchw.reshape(N, cin, hw)

    out = pl.pallas_call(
        partial(_uppredict_kernel, alpha=alpha, n_batch=N,
                cin=cin, cout=cout, h=h, w=w_sp),
        out_shape=jax.ShapeDtypeStruct((N, cout, HW), jnp.float32),
        grid_spec=pltpu.PrefetchScalarGridSpec(
            num_scalar_prefetch=0,
            grid=(1,),                       # single step: both images fused
            in_specs=[
                pl.BlockSpec((N, cin, hw), lambda i: (0, 0, 0)),
                pl.BlockSpec((4 * cout, 9 * cin), lambda i: (0, 0)),
                pl.BlockSpec((4 * cout, 3), lambda i: (0, 0)),
                pl.BlockSpec((9, hw), lambda i: (0, 0)),
                pl.BlockSpec((4, hw, HW), lambda i: (0, 0, 0)),
            ],
            out_specs=pl.BlockSpec((N, cout, HW), lambda i: (0, 0, 0)),
        ),
        compiler_params=pltpu.CompilerParams(
            dimension_semantics=("arbitrary",)),
    )(x_flat, wph, bns, jnp.asarray(mask), jnp.asarray(scat))

    # free metadata reshape back to NCHW: (N, Cout, H*W) -> (N, Cout, H, W)
    return out.reshape(N, cout, H, W)


def _reference(x_nchw, params, *, scale=2, alpha=0.1, eps=1e-5):
    """Pure-JAX reference of the same forward (for correctness check)."""
    x = jnp.transpose(x_nchw, (0, 2, 3, 1))
    x = jnp.repeat(jnp.repeat(x, scale, axis=1), scale, axis=2)
    y = jax.lax.conv_general_dilated(
        x, params["w"], window_strides=(1, 1), padding="SAME",
        dimension_numbers=("NHWC", "HWIO", "NHWC")) + params["b"]
    y = jnp.where(y >= 0, y, alpha * y)
    y = (y - params["running_mean"]) / jnp.sqrt(params["running_var"] + eps)
    y = y * params["gamma"] + params["beta"]
    return jnp.transpose(y, (0, 3, 1, 2))


if __name__ == "__main__":
    N, Cin, Cout = 2, 4, 8
    h = w = 8
    scale, alpha = 2, 0.1

    key = jax.random.PRNGKey(0)
    k1, k2, k3, k4, k5, k6, k7 = jax.random.split(key, 7)
    params = {
        "w": jax.random.normal(k1, (3, 3, Cin, Cout), jnp.float32) * 0.1,
        "b": jax.random.normal(k2, (Cout,), jnp.float32) * 0.1,
        "gamma": 1.0 + 0.1 * jax.random.normal(k3, (Cout,), jnp.float32),
        "beta": 0.1 * jax.random.normal(k4, (Cout,), jnp.float32),
        "running_mean": 0.1 * jax.random.normal(k5, (Cout,), jnp.float32),
        "running_var": 0.5 + 0.5 * jnp.abs(jax.random.normal(k6, (Cout,), jnp.float32)),
    }
    x = jax.random.normal(k7, (N, Cin, h, w), jnp.float32)   # NCHW, like PyTorch

    out = up_predict(x, params, scale=scale, alpha=alpha)
    out = jax.block_until_ready(out)

    ref = _reference(x, params, scale=scale, alpha=alpha)
    assert out.shape == (N, Cout, h * scale, w * scale), out.shape
    assert jnp.allclose(out, ref, rtol=1e-4, atol=1e-4), \
        float(jnp.max(jnp.abs(out - ref)))
    print("KERNEL_OK")
</pallas_src>

<mosaic_0001>
module attributes {stable_mosaic.version = 11 : i64} {
  func.func @_uppredict_kernel(%arg0: i32, %arg1: memref<2x4x64xf32, #tpu.memory_space<vmem>>, %arg2: memref<32x36xf32, #tpu.memory_space<vmem>>, %arg3: memref<32x3xf32, #tpu.memory_space<vmem>>, %arg4: memref<9x64xf32, #tpu.memory_space<vmem>>, %arg5: memref<4x64x256xf32, #tpu.memory_space<vmem>>, %arg6: memref<2x8x256xf32, #tpu.memory_space<vmem>>) attributes {dimension_semantics = [#tpu.dimension_semantics<arbitrary>], iteration_bounds = array<i64: 1>, scalar_prefetch = 0 : i64, scratch_operands = 0 : i64, tpu.core_type = #tpu.core_type<tc>, window_params = [{pipeline_mode = #tpu.pipeline_mode<synchronous>, transform_indices = @transform_0, window_bounds = array<i64: 2, 4, 64>}, {pipeline_mode = #tpu.pipeline_mode<synchronous>, transform_indices = @transform_1, window_bounds = array<i64: 32, 36>}, {pipeline_mode = #tpu.pipeline_mode<synchronous>, transform_indices = @transform_2, window_bounds = array<i64: 32, 3>}, {pipeline_mode = #tpu.pipeline_mode<synchronous>, transform_indices = @transform_3, window_bounds = array<i64: 9, 64>}, {pipeline_mode = #tpu.pipeline_mode<synchronous>, transform_indices = @transform_4, window_bounds = array<i64: 4, 64, 256>}, {pipeline_mode = #tpu.pipeline_mode<synchronous>, transform_indices = @transform_5, window_bounds = array<i64: 2, 8, 256>}]} {
    %c0 = arith.constant 0 : index
    %c0_0 = arith.constant 0 : index
    %0 = vector.load %arg2[%c0, %c0_0] : memref<32x36xf32, #tpu.memory_space<vmem>>, vector<32x36xf32>
    %c0_1 = arith.constant 0 : index
    %c0_2 = arith.constant 0 : index
    %1 = vector.load %arg3[%c0_1, %c0_2] : memref<32x3xf32, #tpu.memory_space<vmem>>, vector<32x3xf32>
    %c0_3 = arith.constant 0 : index
    %c0_4 = arith.constant 0 : index
    %2 = vector.load %arg4[%c0_3, %c0_4] : memref<9x64xf32, #tpu.memory_space<vmem>>, vector<9x64xf32>
    %cst = arith.constant 0.000000e+00 : f32
    %3 = vector.broadcast %cst : f32 to vector<4x16xf32>
    %c0_5 = arith.constant 0 : index
    %c0_6 = arith.constant 0 : index
    %c0_7 = arith.constant 0 : index
    %4 = vector.load %arg1[%c0_5, %c0_6, %c0_7] : memref<2x4x64xf32, #tpu.memory_space<vmem>>, vector<1x4x64xf32>
    %5 = vector.shape_cast %4 : vector<1x4x64xf32> to vector<4x64xf32>
    %6 = tpu.concatenate %3, %5, %3 in 1 : vector<4x16xf32>, vector<4x64xf32>, vector<4x16xf32> -> vector<4x96xf32>
    %7 = vector.extract_strided_slice %6 {offsets = [0, 7], sizes = [4, 64], strides = [1, 1]} : vector<4x96xf32> to vector<4x64xf32>
    %8 = vector.extract_strided_slice %2 {offsets = [0, 0], sizes = [1, 64], strides = [1, 1]} : vector<9x64xf32> to vector<1x64xf32>
    %9 = vector.broadcast %8 : vector<1x64xf32> to vector<4x64xf32>
    %10 = arith.mulf %7, %9 : vector<4x64xf32>
    %11 = vector.extract_strided_slice %6 {offsets = [0, 8], sizes = [4, 64], strides = [1, 1]} : vector<4x96xf32> to vector<4x64xf32>
    %12 = vector.extract_strided_slice %2 {offsets = [1, 0], sizes = [1, 64], strides = [1, 1]} : vector<9x64xf32> to vector<1x64xf32>
    %13 = vector.broadcast %12 : vector<1x64xf32> to vector<4x64xf32>
    %14 = arith.mulf %11, %13 : vector<4x64xf32>
    %15 = vector.extract_strided_slice %6 {offsets = [0, 9], sizes = [4, 64], strides = [1, 1]} : vector<4x96xf32> to vector<4x64xf32>
    %16 = vector.extract_strided_slice %2 {offsets = [2, 0], sizes = [1, 64], strides = [1, 1]} : vector<9x64xf32> to vector<1x64xf32>
    %17 = vector.broadcast %16 : vector<1x64xf32> to vector<4x64xf32>
    %18 = arith.mulf %15, %17 : vector<4x64xf32>
    %19 = vector.extract_strided_slice %6 {offsets = [0, 15], sizes = [4, 64], strides = [1, 1]} : vector<4x96xf32> to vector<4x64xf32>
    %20 = vector.extract_strided_slice %2 {offsets = [3, 0], sizes = [1, 64], strides = [1, 1]} : vector<9x64xf32> to vector<1x64xf32>
    %21 = vector.broadcast %20 : vector<1x64xf32> to vector<4x64xf32>
    %22 = arith.mulf %19, %21 : vector<4x64xf32>
    %23 = vector.extract_strided_slice %6 {offsets = [0, 16], sizes = [4, 64], strides = [1, 1]} : vector<4x96xf32> to vector<4x64xf32>
    %24 = vector.extract_strided_slice %2 {offsets = [4, 0], sizes = [1, 64], strides = [1, 1]} : vector<9x64xf32> to vector<1x64xf32>
    %25 = vector.broadcast %24 : vector<1x64xf32> to vector<4x64xf32>
    %26 = arith.mulf %23, %25 : vector<4x64xf32>
    %27 = vector.extract_strided_slice %6 {offsets = [0, 17], sizes = [4, 64], strides = [1, 1]} : vector<4x96xf32> to vector<4x64xf32>
    %28 = vector.extract_strided_slice %2 {offsets = [5, 0], sizes = [1, 64], strides = [1, 1]} : vector<9x64xf32> to vector<1x64xf32>
    %29 = vector.broadcast %28 : vector<1x64xf32> to vector<4x64xf32>
    %30 = arith.mulf %27, %29 : vector<4x64xf32>
    %31 = vector.extract_strided_slice %6 {offsets = [0, 23], sizes = [4, 64], strides = [1, 1]} : vector<4x96xf32> to vector<4x64xf32>
    %32 = vector.extract_strided_slice %2 {offsets = [6, 0], sizes = [1, 64], strides = [1, 1]} : vector<9x64xf32> to vector<1x64xf32>
    %33 = vector.broadcast %32 : vector<1x64xf32> to vector<4x64xf32>
    %34 = arith.mulf %31, %33 : vector<4x64xf32>
    %35 = vector.extract_strided_slice %6 {offsets = [0, 24], sizes = [4, 64], strides = [1, 1]} : vector<4x96xf32> to vector<4x64xf32>
    %36 = vector.extract_strided_slice %2 {offsets = [7, 0], sizes = [1, 64], strides = [1, 1]} : vector<9x64xf32> to vector<1x64xf32>
    %37 = vector.broadcast %36 : vector<1x64xf32> to vector<4x64xf32>
    %38 = arith.mulf %35, %37 : vector<4x64xf32>
    %39 = vector.extract_strided_slice %6 {offsets = [0, 25], sizes = [4, 64], strides = [1, 1]} : vector<4x96xf32> to vector<4x64xf32>
    %40 = vector.extract_strided_slice %2 {offsets = [8, 0], sizes = [1, 64], strides = [1, 1]} : vector<9x64xf32> to vector<1x64xf32>
    %41 = vector.broadcast %40 : vector<1x64xf32> to vector<4x64xf32>
    %42 = arith.mulf %39, %41 : vector<4x64xf32>
    %43 = tpu.concatenate %10, %14, %18, %22, %26, %30, %34, %38, %42 in 0 : vector<4x64xf32>, vector<4x64xf32>, vector<4x64xf32>, vector<4x64xf32>, vector<4x64xf32>, vector<4x64xf32>, vector<4x64xf32>, vector<4x64xf32>, vector<4x64xf32> -> vector<36x64xf32>
    %cst_8 = arith.constant dense<0.000000e+00> : vector<32x64xf32>
    %44 = tpu.matmul %0, %43, %cst_8 {dimension_numbers = #tpu.dot_dimension_numbers<[1], [0], [0], [1], [0, 0, 1, 1], [], []>} : vector<32x36xf32>, vector<36x64xf32>, vector<32x64xf32> -> vector<32x64xf32>
    %45 = vector.extract_strided_slice %1 {offsets = [0, 0], sizes = [32, 1], strides = [1, 1]} : vector<32x3xf32> to vector<32x1xf32>
    %46 = vector.broadcast %45 : vector<32x1xf32> to vector<32x64xf32>
    %47 = arith.addf %44, %46 : vector<32x64xf32>
    %cst_9 = arith.constant 0.000000e+00 : f32
    %48 = vector.broadcast %cst_9 : f32 to vector<32x64xf32>
    %49 = arith.cmpf oge, %47, %48 : vector<32x64xf32>
    %cst_10 = arith.constant 1.000000e-01 : f32
    %50 = vector.broadcast %cst_10 : f32 to vector<32x64xf32>
    %51 = arith.mulf %50, %47 : vector<32x64xf32>
    %52 = arith.select %49, %47, %51 : vector<32x64xi1>, vector<32x64xf32>
    %53 = vector.extract_strided_slice %1 {offsets = [0, 1], sizes = [32, 1], strides = [1, 1]} : vector<32x3xf32> to vector<32x1xf32>
    %54 = vector.broadcast %53 : vector<32x1xf32> to vector<32x64xf32>
    %55 = arith.mulf %52, %54 : vector<32x64xf32>
    %56 = vector.extract_strided_slice %1 {offsets = [0, 2], sizes = [32, 1], strides = [1, 1]} : vector<32x3xf32> to vector<32x1xf32>
    %57 = vector.broadcast %56 : vector<32x1xf32> to vector<32x64xf32>
    %58 = arith.addf %55, %57 : vector<32x64xf32>
    %59 = vector.extract_strided_slice %58 {offsets = [0, 0], sizes = [8, 64], strides = [1, 1]} : vector<32x64xf32> to vector<8x64xf32>
    %c0_11 = arith.constant 0 : index
    %c0_12 = arith.constant 0 : index
    %c0_13 = arith.constant 0 : index
    %60 = vector.load %arg5[%c0_11, %c0_12, %c0_13] : memref<4x64x256xf32, #tpu.memory_space<vmem>>, vector<1x64x256xf32>
    %61 = vector.shape_cast %60 : vector<1x64x256xf32> to vector<64x256xf32>
    %cst_14 = arith.constant dense<0.000000e+00> : vector<8x256xf32>
    %62 = tpu.matmul %59, %61, %cst_14 {dimension_numbers = #tpu.dot_dimension_numbers<[1], [0], [0], [1], [0, 0, 1, 1], [], []>} : vector<8x64xf32>, vector<64x256xf32>, vector<8x256xf32> -> vector<8x256xf32>
    %63 = vector.extract_strided_slice %58 {offsets = [8, 0], sizes = [8, 64], strides = [1, 1]} : vector<32x64xf32> to vector<8x64xf32>
    %c1 = arith.constant 1 : index
    %c0_15 = arith.constant 0 : index
    %c0_16 = arith.constant 0 : index
    %64 = vector.load %arg5[%c1, %c0_15, %c0_16] : memref<4x64x256xf32, #tpu.memory_space<vmem>>, vector<1x64x256xf32>
    %65 = vector.shape_cast %64 : vector<1x64x256xf32> to vector<64x256xf32>
    %cst_17 = arith.constant dense<0.000000e+00> : vector<8x256xf32>
    %66 = tpu.matmul %63, %65, %cst_17 {dimension_numbers = #tpu.dot_dimension_numbers<[1], [0], [0], [1], [0, 0, 1, 1], [], []>} : vector<8x64xf32>, vector<64x256xf32>, vector<8x256xf32> -> vector<8x256xf32>
    %67 = arith.addf %62, %66 : vector<8x256xf32>
    %68 = vector.extract_strided_slice %58 {offsets = [16, 0], sizes = [8, 64], strides = [1, 1]} : vector<32x64xf32> to vector<8x64xf32>
    %c2 = arith.constant 2 : index
    %c0_18 = arith.constant 0 : index
    %c0_19 = arith.constant 0 : index
    %69 = vector.load %arg5[%c2, %c0_18, %c0_19] : memref<4x64x256xf32, #tpu.memory_space<vmem>>, vector<1x64x256xf32>
    %70 = vector.shape_cast %69 : vector<1x64x256xf32> to vector<64x256xf32>
    %cst_20 = arith.constant dense<0.000000e+00> : vector<8x256xf32>
    %71 = tpu.matmul %68, %70, %cst_20 {dimension_numbers = #tpu.dot_dimension_numbers<[1], [0], [0], [1], [0, 0, 1, 1], [], []>} : vector<8x64xf32>, vector<64x256xf32>, vector<8x256xf32> -> vector<8x256xf32>
    %72 = arith.addf %67, %71 : vector<8x256xf32>
    %73 = vector.extract_strided_slice %58 {offsets = [24, 0], sizes = [8, 64], strides = [1, 1]} : vector<32x64xf32> to vector<8x64xf32>
    %c3 = arith.constant 3 : index
    %c0_21 = arith.constant 0 : index
    %c0_22 = arith.constant 0 : index
    %74 = vector.load %arg5[%c3, %c0_21, %c0_22] : memref<4x64x256xf32, #tpu.memory_space<vmem>>, vector<1x64x256xf32>
    %75 = vector.shape_cast %74 : vector<1x64x256xf32> to vector<64x256xf32>
    %cst_23 = arith.constant dense<0.000000e+00> : vector<8x256xf32>
    %76 = tpu.matmul %73, %75, %cst_23 {dimension_numbers = #tpu.dot_dimension_numbers<[1], [0], [0], [1], [0, 0, 1, 1], [], []>} : vector<8x64xf32>, vector<64x256xf32>, vector<8x256xf32> -> vector<8x256xf32>
    %77 = arith.addf %72, %76 : vector<8x256xf32>
    %c0_24 = arith.constant 0 : index
    %c0_25 = arith.constant 0 : index
    %c0_26 = arith.constant 0 : index
    %78 = vector.load %arg6[%c0_24, %c0_25, %c0_26] : memref<2x8x256xf32, #tpu.memory_space<vmem>>, vector<1x8x256xf32>
    %79 = vector.shape_cast %78 : vector<1x8x256xf32> to vector<8x256xf32>
    %80 = vector.shape_cast %77 : vector<8x256xf32> to vector<1x8x256xf32>
    tpu.vector_store %arg6[%c0_24, %c0_25, %c0_26], %80 {strides = array<i32>} : memref<2x8x256xf32, #tpu.memory_space<vmem>>, vector<1x8x256xf32>,
    %c1_27 = arith.constant 1 : index
    %c0_28 = arith.constant 0 : index
    %c0_29 = arith.constant 0 : index
    %81 = vector.load %arg1[%c1_27, %c0_28, %c0_29] : memref<2x4x64xf32, #tpu.memory_space<vmem>>, vector<1x4x64xf32>
    %82 = vector.shape_cast %81 : vector<1x4x64xf32> to vector<4x64xf32>
    %83 = tpu.concatenate %3, %82, %3 in 1 : vector<4x16xf32>, vector<4x64xf32>, vector<4x16xf32> -> vector<4x96xf32>
    %84 = vector.extract_strided_slice %83 {offsets = [0, 7], sizes = [4, 64], strides = [1, 1]} : vector<4x96xf32> to vector<4x64xf32>
    %85 = vector.extract_strided_slice %2 {offsets = [0, 0], sizes = [1, 64], strides = [1, 1]} : vector<9x64xf32> to vector<1x64xf32>
    %86 = vector.broadcast %85 : vector<1x64xf32> to vector<4x64xf32>
    %87 = arith.mulf %84, %86 : vector<4x64xf32>
    %88 = vector.extract_strided_slice %83 {offsets = [0, 8], sizes = [4, 64], strides = [1, 1]} : vector<4x96xf32> to vector<4x64xf32>
    %89 = vector.extract_strided_slice %2 {offsets = [1, 0], sizes = [1, 64], strides = [1, 1]} : vector<9x64xf32> to vector<1x64xf32>
    %90 = vector.broadcast %89 : vector<1x64xf32> to vector<4x64xf32>
    %91 = arith.mulf %88, %90 : vector<4x64xf32>
    %92 = vector.extract_strided_slice %83 {offsets = [0, 9], sizes = [4, 64], strides = [1, 1]} : vector<4x96xf32> to vector<4x64xf32>
    %93 = vector.extract_strided_slice %2 {offsets = [2, 0], sizes = [1, 64], strides = [1, 1]} : vector<9x64xf32> to vector<1x64xf32>
    %94 = vector.broadcast %93 : vector<1x64xf32> to vector<4x64xf32>
    %95 = arith.mulf %92, %94 : vector<4x64xf32>
    %96 = vector.extract_strided_slice %83 {offsets = [0, 15], sizes = [4, 64], strides = [1, 1]} : vector<4x96xf32> to vector<4x64xf32>
    %97 = vector.extract_strided_slice %2 {offsets = [3, 0], sizes = [1, 64], strides = [1, 1]} : vector<9x64xf32> to vector<1x64xf32>
    %98 = vector.broadcast %97 : vector<1x64xf32> to vector<4x64xf32>
    %99 = arith.mulf %96, %98 : vector<4x64xf32>
    %100 = vector.extract_strided_slice %83 {offsets = [0, 16], sizes = [4, 64], strides = [1, 1]} : vector<4x96xf32> to vector<4x64xf32>
    %101 = vector.extract_strided_slice %2 {offsets = [4, 0], sizes = [1, 64], strides = [1, 1]} : vector<9x64xf32> to vector<1x64xf32>
    %102 = vector.broadcast %101 : vector<1x64xf32> to vector<4x64xf32>
    %103 = arith.mulf %100, %102 : vector<4x64xf32>
    %104 = vector.extract_strided_slice %83 {offsets = [0, 17], sizes = [4, 64], strides = [1, 1]} : vector<4x96xf32> to vector<4x64xf32>
    %105 = vector.extract_strided_slice %2 {offsets = [5, 0], sizes = [1, 64], strides = [1, 1]} : vector<9x64xf32> to vector<1x64xf32>
    %106 = vector.broadcast %105 : vector<1x64xf32> to vector<4x64xf32>
    %107 = arith.mulf %104, %106 : vector<4x64xf32>
    %108 = vector.extract_strided_slice %83 {offsets = [0, 23], sizes = [4, 64], strides = [1, 1]} : vector<4x96xf32> to vector<4x64xf32>
    %109 = vector.extract_strided_slice %2 {offsets = [6, 0], sizes = [1, 64], strides = [1, 1]} : vector<9x64xf32> to vector<1x64xf32>
    %110 = vector.broadcast %109 : vector<1x64xf32> to vector<4x64xf32>
    %111 = arith.mulf %108, %110 : vector<4x64xf32>
    %112 = vector.extract_strided_slice %83 {offsets = [0, 24], sizes = [4, 64], strides = [1, 1]} : vector<4x96xf32> to vector<4x64xf32>
    %113 = vector.extract_strided_slice %2 {offsets = [7, 0], sizes = [1, 64], strides = [1, 1]} : vector<9x64xf32> to vector<1x64xf32>
    %114 = vector.broadcast %113 : vector<1x64xf32> to vector<4x64xf32>
    %115 = arith.mulf %112, %114 : vector<4x64xf32>
    %116 = vector.extract_strided_slice %83 {offsets = [0, 25], sizes = [4, 64], strides = [1, 1]} : vector<4x96xf32> to vector<4x64xf32>
    %117 = vector.extract_strided_slice %2 {offsets = [8, 0], sizes = [1, 64], strides = [1, 1]} : vector<9x64xf32> to vector<1x64xf32>
    %118 = vector.broadcast %117 : vector<1x64xf32> to vector<4x64xf32>
    %119 = arith.mulf %116, %118 : vector<4x64xf32>
    %120 = tpu.concatenate %87, %91, %95, %99, %103, %107, %111, %115, %119 in 0 : vector<4x64xf32>, vector<4x64xf32>, vector<4x64xf32>, vector<4x64xf32>, vector<4x64xf32>, vector<4x64xf32>, vector<4x64xf32>, vector<4x64xf32>, vector<4x64xf32> -> vector<36x64xf32>
    %cst_30 = arith.constant dense<0.000000e+00> : vector<32x64xf32>
    %121 = tpu.matmul %0, %120, %cst_30 {dimension_numbers = #tpu.dot_dimension_numbers<[1], [0], [0], [1], [0, 0, 1, 1], [], []>} : vector<32x36xf32>, vector<36x64xf32>, vector<32x64xf32> -> vector<32x64xf32>
    %122 = vector.extract_strided_slice %1 {offsets = [0, 0], sizes = [32, 1], strides = [1, 1]} : vector<32x3xf32> to vector<32x1xf32>
    %123 = vector.broadcast %122 : vector<32x1xf32> to vector<32x64xf32>
    %124 = arith.addf %121, %123 : vector<32x64xf32>
    %cst_31 = arith.constant 0.000000e+00 : f32
    %125 = vector.broadcast %cst_31 : f32 to vector<32x64xf32>
    %126 = arith.cmpf oge, %124, %125 : vector<32x64xf32>
    %cst_32 = arith.constant 1.000000e-01 : f32
    %127 = vector.broadcast %cst_32 : f32 to vector<32x64xf32>
    %128 = arith.mulf %127, %124 : vector<32x64xf32>
    %129 = arith.select %126, %124, %128 : vector<32x64xi1>, vector<32x64xf32>
    %130 = vector.extract_strided_slice %1 {offsets = [0, 1], sizes = [32, 1], strides = [1, 1]} : vector<32x3xf32> to vector<32x1xf32>
    %131 = vector.broadcast %130 : vector<32x1xf32> to vector<32x64xf32>
    %132 = arith.mulf %129, %131 : vector<32x64xf32>
    %133 = vector.extract_strided_slice %1 {offsets = [0, 2], sizes = [32, 1], strides = [1, 1]} : vector<32x3xf32> to vector<32x1xf32>
    %134 = vector.broadcast %133 : vector<32x1xf32> to vector<32x64xf32>
    %135 = arith.addf %132, %134 : vector<32x64xf32>
    %136 = vector.extract_strided_slice %135 {offsets = [0, 0], sizes = [8, 64], strides = [1, 1]} : vector<32x64xf32> to vector<8x64xf32>
    %c0_33 = arith.constant 0 : index
    %c0_34 = arith.constant 0 : index
    %c0_35 = arith.constant 0 : index
    %137 = vector.load %arg5[%c0_33, %c0_34, %c0_35] : memref<4x64x256xf32, #tpu.memory_space<vmem>>, vector<1x64x256xf32>
    %138 = vector.shape_cast %137 : vector<1x64x256xf32> to vector<64x256xf32>
    %cst_36 = arith.constant dense<0.000000e+00> : vector<8x256xf32>
    %139 = tpu.matmul %136, %138, %cst_36 {dimension_numbers = #tpu.dot_dimension_numbers<[1], [0], [0], [1], [0, 0, 1, 1], [], []>} : vector<8x64xf32>, vector<64x256xf32>, vector<8x256xf32> -> vector<8x256xf32>
    %140 = vector.extract_strided_slice %135 {offsets = [8, 0], sizes = [8, 64], strides = [1, 1]} : vector<32x64xf32> to vector<8x64xf32>
    %c1_37 = arith.constant 1 : index
    %c0_38 = arith.constant 0 : index
    %c0_39 = arith.constant 0 : index
    %141 = vector.load %arg5[%c1_37, %c0_38, %c0_39] : memref<4x64x256xf32, #tpu.memory_space<vmem>>, vector<1x64x256xf32>
    %142 = vector.shape_cast %141 : vector<1x64x256xf32> to vector<64x256xf32>
    %cst_40 = arith.constant dense<0.000000e+00> : vector<8x256xf32>
    %143 = tpu.matmul %140, %142, %cst_40 {dimension_numbers = #tpu.dot_dimension_numbers<[1], [0], [0], [1], [0, 0, 1, 1], [], []>} : vector<8x64xf32>, vector<64x256xf32>, vector<8x256xf32> -> vector<8x256xf32>
    %144 = arith.addf %139, %143 : vector<8x256xf32>
    %145 = vector.extract_strided_slice %135 {offsets = [16, 0], sizes = [8, 64], strides = [1, 1]} : vector<32x64xf32> to vector<8x64xf32>
    %c2_41 = arith.constant 2 : index
    %c0_42 = arith.constant 0 : index
    %c0_43 = arith.constant 0 : index
    %146 = vector.load %arg5[%c2_41, %c0_42, %c0_43] : memref<4x64x256xf32, #tpu.memory_space<vmem>>, vector<1x64x256xf32>
    %147 = vector.shape_cast %146 : vector<1x64x256xf32> to vector<64x256xf32>
    %cst_44 = arith.constant dense<0.000000e+00> : vector<8x256xf32>
    %148 = tpu.matmul %145, %147, %cst_44 {dimension_numbers = #tpu.dot_dimension_numbers<[1], [0], [0], [1], [0, 0, 1, 1], [], []>} : vector<8x64xf32>, vector<64x256xf32>, vector<8x256xf32> -> vector<8x256xf32>
    %149 = arith.addf %144, %148 : vector<8x256xf32>
    %150 = vector.extract_strided_slice %135 {offsets = [24, 0], sizes = [8, 64], strides = [1, 1]} : vector<32x64xf32> to vector<8x64xf32>
    %c3_45 = arith.constant 3 : index
    %c0_46 = arith.constant 0 : index
    %c0_47 = arith.constant 0 : index
    %151 = vector.load %arg5[%c3_45, %c0_46, %c0_47] : memref<4x64x256xf32, #tpu.memory_space<vmem>>, vector<1x64x256xf32>
    %152 = vector.shape_cast %151 : vector<1x64x256xf32> to vector<64x256xf32>
    %cst_48 = arith.constant dense<0.000000e+00> : vector<8x256xf32>
    %153 = tpu.matmul %150, %152, %cst_48 {dimension_numbers = #tpu.dot_dimension_numbers<[1], [0], [0], [1], [0, 0, 1, 1], [], []>} : vector<8x64xf32>, vector<64x256xf32>, vector<8x256xf32> -> vector<8x256xf32>
    %154 = arith.addf %149, %153 : vector<8x256xf32>
    %c1_49 = arith.constant 1 : index
    %c0_50 = arith.constant 0 : index
    %c0_51 = arith.constant 0 : index
    %155 = vector.load %arg6[%c1_49, %c0_50, %c0_51] : memref<2x8x256xf32, #tpu.memory_space<vmem>>, vector<1x8x256xf32>
    %156 = vector.shape_cast %155 : vector<1x8x256xf32> to vector<8x256xf32>
    %157 = vector.shape_cast %154 : vector<8x256xf32> to vector<1x8x256xf32>
    tpu.vector_store %arg6[%c1_49, %c0_50, %c0_51], %157 {strides = array<i32>} : memref<2x8x256xf32, #tpu.memory_space<vmem>>, vector<1x8x256xf32>,
    return
  }
  func.func @transform_0(%arg0: i32) -> (i32, i32, i32) {
    %c0_i32 = arith.constant 0 : i32
    %c0_i32_0 = arith.constant 0 : i32
    %c0_i32_1 = arith.constant 0 : i32
    %c0_i32_2 = arith.constant 0 : i32
    return %c0_i32, %c0_i32_0, %c0_i32_1 : i32, i32, i32
  }
  func.func @transform_1(%arg0: i32) -> (i32, i32) {
    %c0_i32 = arith.constant 0 : i32
    %c0_i32_0 = arith.constant 0 : i32
    %c0_i32_1 = arith.constant 0 : i32
    return %c0_i32, %c0_i32_0 : i32, i32
  }
  func.func @transform_2(%arg0: i32) -> (i32, i32) {
    %c0_i32 = arith.constant 0 : i32
    %c0_i32_0 = arith.constant 0 : i32
    %c0_i32_1 = arith.constant 0 : i32
    return %c0_i32, %c0_i32_0 : i32, i32
  }
  func.func @transform_3(%arg0: i32) -> (i32, i32) {
    %c0_i32 = arith.constant 0 : i32
    %c0_i32_0 = arith.constant 0 : i32
    %c0_i32_1 = arith.constant 0 : i32
    return %c0_i32, %c0_i32_0 : i32, i32
  }
  func.func @transform_4(%arg0: i32) -> (i32, i32, i32) {
    %c0_i32 = arith.constant 0 : i32
    %c0_i32_0 = arith.constant 0 : i32
    %c0_i32_1 = arith.constant 0 : i32
    %c0_i32_2 = arith.constant 0 : i32
    return %c0_i32, %c0_i32_0, %c0_i32_1 : i32, i32, i32
  }
  func.func @transform_5(%arg0: i32) -> (i32, i32, i32) {
    %c0_i32 = arith.constant 0 : i32
    %c0_i32_0 = arith.constant 0 : i32
    %c0_i32_1 = arith.constant 0 : i32
    %c0_i32_2 = arith.constant 0 : i32
    return %c0_i32, %c0_i32_0, %c0_i32_1 : i32, i32, i32
  }
}

</mosaic_0001>

<llo_original>
// kernel: tpu_custom_call.1
$region0: #{tpu_custom_call.1}
  #allocation0 [shape = 'u32[]', space=smem, size = 0x4, offset = 0x4, fixed_abs, tag = 'smem constant byte address 0x4 - core index']
  #allocation1 [shape = 'u32[144,128]{1,0:T(1,128)}', space=vmem, size = 0x12000, scoped, tag = 'internal scratch']
  %s0 = inlined_call_operand.hbm [shape: f32[2,4,64], index: 0, kind: input, shape index: {}]
  %s1 = inlined_call_operand.vmem [shape: f32[32,36], index: 1, kind: input, shape index: {}]
  %s2 = inlined_call_operand.vmem [shape: f32[32,3], index: 2, kind: input, shape index: {}]
  %s3 = inlined_call_operand.hbm [shape: f32[9,64], index: 3, kind: input, shape index: {}]
  %s4 = inlined_call_operand.hbm [shape: f32[4,64,256], index: 4, kind: input, shape index: {}]
  %s5 = inlined_call_operand.hbm [shape: f32[2,8,256], index: 5, kind: output, shape index: {}]
  %s6 = sld [smem:[#allocation0]]
  $region42: #{tpu_custom_call.1} parent=0
    _
  %s8 = ssub.s32 1, %s6
  %s9 = scalar_select 0, %s8, %s6
  $region1: #{tpu_custom_call.1} parent=0
    #allocation2 [shape = 'u8[4096]{0}', space=vmem, size = 0x1000, scoped, tag = 'input window, operand 0, single buffered']
    #allocation3 [shape = 's32[1]{0}', space=sflag, size = 0x4, scoped, tag = 'scoped memory for tpu_custom_call.1']
    #allocation4 [shape = 's32[1]{0}', space=sflag, size = 0x4, scoped, tag = 'scoped memory for tpu_custom_call.1']
    #allocation5 [shape = 'u8[8192]{0}', space=vmem, size = 0x2000, scoped, tag = 'input window, operand 3, single buffered']
    #allocation6 [shape = 's32[1]{0}', space=sflag, size = 0x4, scoped, tag = 'scoped memory for tpu_custom_call.1']
    #allocation7 [shape = 'u8[262144]{0}', space=vmem, size = 0x40000, scoped, tag = 'input window, operand 4, single buffered']
    #allocation8 [shape = 'u8[16384]{0}', space=vmem, size = 0x4000, scoped, tag = 'output window, operand 0, single buffered']
    %10 = vsyncpa [#allocation3], 0
    %11 = vsyncpa [#allocation6], 0
    %12 = vsyncpa [#allocation4], 0
    // Predicated region
    $region2: #{tpu_custom_call.1} parent=1 // pred_check
      _
    $region3: #{tpu_custom_call.1} parent=1 // pred_check_branch
      %14 = sbr.rel (0) target = $region5
    $region4: #{tpu_custom_call.1} parent=1 // pred_region
      %s16 = ssub.s32 128, 128
      %17 = vsyncadd [#allocation3], %s16
      %s18 = sshll.u32 [#allocation2], 4
      %s19 = int_to_ptr.vmem [resolvable:$true] %s18
      %24 = dma.hbm_to_vmem [thread:$0]  %s0, 128, %s19, [#allocation3], 64, 64, 4
    $region5: #{tpu_custom_call.1} parent=1 // pred_fallthru
      _
    // Predicated region
    $region6: #{tpu_custom_call.1} parent=1 // pred_check
      _
    $region7: #{tpu_custom_call.1} parent=1 // pred_check_branch
      %26 = sbr.rel (0) target = $region9
    $region8: #{tpu_custom_call.1} parent=1 // pred_region
      _
    $region9: #{tpu_custom_call.1} parent=1 // pred_fallthru
      _
    // Predicated region
    $region10: #{tpu_custom_call.1} parent=1 // pred_check
      _
    $region11: #{tpu_custom_call.1} parent=1 // pred_check_branch
      %28 = sbr.rel (0) target = $region13
    $region12: #{tpu_custom_call.1} parent=1 // pred_region
      _
    $region13: #{tpu_custom_call.1} parent=1 // pred_fallthru
      _
    // Predicated region
    $region14: #{tpu_custom_call.1} parent=1 // pred_check
      _
    $region15: #{tpu_custom_call.1} parent=1 // pred_check_branch
      %30 = sbr.rel (0) target = $region17
    $region16: #{tpu_custom_call.1} parent=1 // pred_region
      %s32 = ssub.s32 256, 256
      %33 = vsyncadd [#allocation6], %s32
      %s34 = sshll.u32 [#allocation5], 4
      %s35 = int_to_ptr.vmem [resolvable:$true] %s34
      %40 = dma.hbm_to_vmem [thread:$0]  %s3, 256, %s35, [#allocation6], 128, 128, 8
    $region17: #{tpu_custom_call.1} parent=1 // pred_fallthru
      _
    // Predicated region
    $region18: #{tpu_custom_call.1} parent=1 // pred_check
      _
    $region19: #{tpu_custom_call.1} parent=1 // pred_check_branch
      %42 = sbr.rel (0) target = $region21
    $region20: #{tpu_custom_call.1} parent=1 // pred_region
      %s44 = ssub.s32 8192, 8192
      %45 = vsyncadd [#allocation6], %s44
      %s46 = sshll.u32 [#allocation7], 4
      %s47 = int_to_ptr.vmem [resolvable:$true] %s46
      %52 = dma.hbm_to_vmem [thread:$0]  %s4, 8192, %s47, [#allocation6], 256, 256, 16
    $region21: #{tpu_custom_call.1} parent=1 // pred_fallthru
      _
    // Predicated region
    $region22: #{tpu_custom_call.1} parent=1 // pred_check
      _
    $region23: #{tpu_custom_call.1} parent=1 // pred_check_branch
      %54 = sbr.rel (0) target = $region25
    $region24: #{tpu_custom_call.1} parent=1 // pred_region
      %55 = dma.done [#allocation3], 128
    $region25: #{tpu_custom_call.1} parent=1 // pred_fallthru
      _
    // Predicated region
    $region26: #{tpu_custom_call.1} parent=1 // pred_check
      _
    $region27: #{tpu_custom_call.1} parent=1 // pred_check_branch
      %57 = sbr.rel (0) target = $region29
    $region28: #{tpu_custom_call.1} parent=1 // pred_region
      %58 = dma.done [#allocation6], 256
    $region29: #{tpu_custom_call.1} parent=1 // pred_fallthru
      _
    // Predicated region
    $region30: #{tpu_custom_call.1} parent=1 // pred_check
      _
    $region31: #{tpu_custom_call.1} parent=1 // pred_check_branch
      %60 = sbr.rel (0) target = $region33
    $region32: #{tpu_custom_call.1} parent=1 // pred_region
      %61 = dma.done [#allocation6], 8192
    $region33: #{tpu_custom_call.1} parent=1 // pred_fallthru
      _
    %v62 = vld [vmem:[%s1] sm:$0xff]
    %v63 = vld [vmem:[%s1 + $0x8] sm:$0xff]
    %v64 = vld [vmem:[%s1 + $0x10] sm:$0xff]
    %v65 = vld [vmem:[%s1 + $0x18] sm:$0xff]
    %v66 = vld [vmem:[%s2] sm:$0xff]
    %v67 = vld [vmem:[%s2 + $0x8] sm:$0xff]
    %v68 = vld [vmem:[%s2 + $0x10] sm:$0xff]
    %v69 = vld [vmem:[%s2 + $0x18] sm:$0xff]
    %v70 = vld [vmem:[#allocation5] sm:$0xff]
    %v71 = vld [vmem:[#allocation5 + $0x8] sm:$0x1]
    %v72 = vld [vmem:[#allocation2] sm:$0xf]
    %74 = vrot.lane.b32.xlu0 %v72, 16
    %v75 = vpop.permute.xlu0 %74
    %vm77 = vcmask 130048
    %v78 = vsel %vm77, 0.0, %v75
    %vm79 = vcmask 654336
    %v80 = vsel %vm79, %v78, 0.0
    %v81 = vlaneseq
    %v82 = vshrl.u32 %v81, 7
    %v83 = vsub.s32 0, %v82
    %v84 = vrot.slane %v70, %v83
    %86 = vrot.lane.b32.xlu0 %v84, 7
    %v87 = vpop.permute.xlu0 %86
    %v89 = vmul.f32 %v80, %v87
    %v90 = vlaneseq
    %v91 = vshrl.u32 %v90, 7
    %v92 = vsub.s32 1, %v91
    %v93 = vrot.slane %v70, %v92
    %95 = vrot.lane.b32.xlu0 %v93, 8
    %v96 = vpop.permute.xlu0 %95
    %v98 = vmul.f32 %v80, %v96
    %v99 = vlaneseq
    %v100 = vshrl.u32 %v99, 7
    %v101 = vsub.s32 2, %v100
    %v102 = vrot.slane %v70, %v101
    %104 = vrot.lane.b32.xlu0 %v102, 9
    %v105 = vpop.permute.xlu0 %104
    %v107 = vmul.f32 %v80, %v105
    %v108 = vlaneseq
    %v109 = vshrl.u32 %v108, 7
    %v110 = vsub.s32 3, %v109
    %v111 = vrot.slane %v70, %v110
    %113 = vrot.lane.b32.xlu0 %v111, 15
    %v114 = vpop.permute.xlu0 %113
    %v116 = vmul.f32 %v80, %v114
    %v117 = vlaneseq
    %v118 = vshrl.u32 %v117, 7
    %v119 = vsub.s32 4, %v118
    %v120 = vrot.slane %v70, %v119
    %122 = vrot.lane.b32.xlu0 %v120, 16
    %v123 = vpop.permute.xlu0 %122
    %v125 = vmul.f32 %v80, %v123
    %v126 = vlaneseq
    %v127 = vshrl.u32 %v126, 7
    %v128 = vsub.s32 5, %v127
    %v129 = vrot.slane %v70, %v128
    %131 = vrot.lane.b32.xlu0 %v129, 17
    %v132 = vpop.permute.xlu0 %131
    %v134 = vmul.f32 %v80, %v132
    %v135 = vlaneseq
    %v136 = vshrl.u32 %v135, 7
    %v137 = vsub.s32 6, %v136
    %v138 = vrot.slane %v70, %v137
    %140 = vrot.lane.b32.xlu0 %v138, 23
    %v141 = vpop.permute.xlu0 %140
    %v143 = vmul.f32 %v80, %v141
    %v144 = vlaneseq
    %v145 = vshrl.u32 %v144, 7
    %v146 = vsub.s32 7, %v145
    %v147 = vrot.slane %v70, %v146
    %149 = vrot.lane.b32.xlu0 %v147, 24
    %v150 = vpop.permute.xlu0 %149
    %v152 = vmul.f32 %v80, %v150
    %v153 = vlaneseq
    %v154 = vshrl.u32 %v153, 7
    %v155 = vsub.s32 0, %v154
    %v156 = vrot.slane %v71, %v155
    %158 = vrot.lane.b32.xlu0 %v156, 25
    %v159 = vpop.permute.xlu0 %158
    %v161 = vmul.f32 %v80, %v159
    %v163 = vrot.slane %v98, 4
    %164 = vrot.lane.b32.xlu0 %v163, 127
    %v165 = vpop.permute.xlu0 %164
    %168 = vrot.lane.b32.xlu0 %v107, 126
    %v169 = vpop.permute.xlu0 %168
    %v172 = vrot.slane %v116, 4
    %173 = vrot.lane.b32.xlu0 %v172, 120
    %v174 = vpop.permute.xlu0 %173
    %177 = vrot.lane.b32.xlu0 %v125, 119
    %v178 = vpop.permute.xlu0 %177
    %v181 = vrot.slane %v134, 4
    %182 = vrot.lane.b32.xlu0 %v181, 118
    %v183 = vpop.permute.xlu0 %182
    %186 = vrot.lane.b32.xlu0 %v143, 112
    %v187 = vpop.permute.xlu0 %186
    %v190 = vrot.slane %v152, 4
    %191 = vrot.lane.b32.xlu0 %v190, 111
    %v192 = vpop.permute.xlu0 %191
    %195 = vrot.lane.b32.xlu0 %v161, 110
    %v196 = vpop.permute.xlu0 %195
    %vm197 = vcmask 1043456
    %v198 = vsel %vm197, %v89, %v165
    %v199 = vsel %vm197, %v169, %v174
    %v200 = vsel %vm197, %v178, %v183
    %v201 = vsel %vm197, %v187, %v192
    %203 = vset.pattern.permute.xlu0 0
    %204 = vperm.xlu0 %203, %v66
    %v205 = vpop.permute.xlu0 %204
    %208 = vset.pattern.permute.xlu0 0
    %209 = vperm.xlu0 %208, %v67
    %v210 = vpop.permute.xlu0 %209
    %213 = vset.pattern.permute.xlu0 0
    %214 = vperm.xlu0 %213, %v68
    %v215 = vpop.permute.xlu0 %214
    %218 = vset.pattern.permute.xlu0 0
    %219 = vperm.xlu0 %218, %v69
    %v220 = vpop.permute.xlu0 %219
    %226 = vrot.lane.b32.xlu0 %v198, 121
    %v227 = vpop.permute.xlu0 %226
    %228 = vrot.lane.b32.xlu0 %v199, 121
    %v229 = vpop.permute.xlu0 %228
    %230 = vrot.lane.b32.xlu0 %v200, 121
    %v231 = vpop.permute.xlu0 %230
    %232 = vrot.lane.b32.xlu0 %v201, 121
    %v233 = vpop.permute.xlu0 %232
    %234 = vrot.lane.b32.xlu0 %v196, 121
    %v235 = vpop.permute.xlu0 %234
    %vm240 = vcmask 293888
    %v242 = vsel %vm240, %v62, 0
    %v245 = vsel %vm240, %v63, 0
    %v248 = vsel %vm240, %v64, 0
    %v251 = vsel %vm240, %v65, 0
    %v253 = vsel %vm197, %v235, 0
    %255 = vmatprep.subr.mxu0 0.0
    %256 = vmatpush1.msra.mxu0 %v227
    %257 = vmatprep.subr.mxu0 0.0
    %258 = vmatpush1.msra.mxu0 %v229
    %259 = vmatprep.subr.mxu0 0.0
    %260 = vmatpush1.msra.mxu0 %v231
    %261 = vmatprep.subr.mxu0 0.0
    %262 = vmatpush1.msra.mxu0 %v233
    %263 = vmatprep.subr.mxu0 0.0
    %264 = vmatpush1.msra.mxu0 %v253
    %265 = vmatprep.subr.mxu0 0.0
    %266 = vmatpush1.msra.mxu0 0.0
    %267 = vmatprep.subr.mxu0 0.0
    %268 = vmatpush1.msra.mxu0 0.0
    %269 = vmatprep.subr.mxu0 0.0
    %270 = vmatpush1.msra.mxu0 0.0
    %271 = vmatprep.subr.mxu0 0.0
    %272 = vmatpush1.msra.mxu0 0.0
    %273 = vmatprep.subr.mxu0 0.0
    %274 = vmatpush1.msra.mxu0 0.0
    %275 = vmatprep.subr.mxu0 0.0
    %276 = vmatpush1.msra.mxu0 0.0
    %277 = vmatprep.subr.mxu0 0.0
    %278 = vmatpush1.msra.mxu0 0.0
    %279 = vmatprep.subr.mxu0 0.0
    %280 = vmatpush1.msra.mxu0 0.0
    %281 = vmatprep.subr.mxu0 0.0
    %282 = vmatpush1.msra.mxu0 0.0
    %283 = vmatprep.subr.mxu0 0.0
    %284 = vmatpush1.msra.mxu0 0.0
    %285 = vmatprep.subr.mxu0 0.0
    %286 = vmatpush1.msra.mxu0 0.0
    %287 = vmatprep.subr.mxu0 0.0
    %288 = vmatpush1.msra.mxu0 0.0
    %289 = vmatprep.subr.mxu0 0.0
    %290 = vmatpush1.msra.mxu0 0.0
    %291 = vmatprep.subr.mxu0 0.0
    %292 = vmatpush1.msra.mxu0 0.0
    %293 = vmatprep.subr.mxu0 0.0
    %294 = vmatpush1.msra.mxu0 0.0
    %295 = vmatprep.subr.mxu0 0.0
    %296 = vmatpush1.msra.mxu0 0.0
    %297 = vmatprep.subr.mxu0 0.0
    %298 = vmatpush1.msra.mxu0 0.0
    %299 = vmatprep.subr.mxu0 0.0
    %300 = vmatpush1.msra.mxu0 0.0
    %301 = vmatprep.subr.mxu0 0.0
    %302 = vmatpush1.msra.mxu0 0.0
    %303 = vmatprep.subr.mxu0 0.0
    %304 = vmatpush1.msra.mxu0 0.0
    %305 = vmatprep.subr.mxu0 0.0
    %306 = vmatpush1.msra.mxu0 0.0
    %307 = vmatprep.subr.mxu0 0.0
    %308 = vmatpush1.msra.mxu0 0.0
    %309 = vmatprep.subr.mxu0 0.0
    %310 = vmatpush1.msra.mxu0 0.0
    %311 = vmatprep.subr.mxu0 0.0
    %312 = vmatpush1.msra.mxu0 0.0
    %313 = vmatprep.subr.mxu0 0.0
    %314 = vmatpush1.msra.mxu0 0.0
    %315 = vmatprep.subr.mxu0 0.0
    %316 = vmatpush1.msra.mxu0 0.0
    %317 = vmatprep.subr.mxu0 0.0
    %318 = vmatpush1.msra.mxu0 0.0
    %319 = vmatprep.mubr.f32.mxu0 0.0
    %320 = vmatmul.mubr.f32.gmra.mrb[0].mxu0 %v242
    %v321 = vpop.f32.mrb[0].mxu0
    %v322 = vadd.f32 %v205, %v321
    %v323 = vpop.f32.mrb[0].mxu0
    %324 = vmatprep.mubr.f32.mxu0 0.0
    %325 = vmatmul.mubr.f32.gmra.mrb[0].mxu0 %v245
    %v326 = vpop.f32.mrb[0].mxu0
    %v327 = vadd.f32 %v210, %v326
    %v328 = vpop.f32.mrb[0].mxu0
    %329 = vmatprep.mubr.f32.mxu0 0.0
    %330 = vmatmul.mubr.f32.gmra.mrb[0].mxu0 %v248
    %v331 = vpop.f32.mrb[0].mxu0
    %v332 = vadd.f32 %v215, %v331
    %v333 = vpop.f32.mrb[0].mxu0
    %334 = vmatprep.mubr.f32.mxu0 0.0
    %335 = vmatmul.mubr.f32.gmra.mrb[0].mxu0 %v251
    %v336 = vpop.f32.mrb[0].mxu0
    %v337 = vadd.f32 %v220, %v336
    %v338 = vpop.f32.mrb[0].mxu0
    %339 = vdwg.mxu0
    %vm340 = vcmp.ge.f32.partialorder %v322, 0.0
    %vm341 = vcmp.ge.f32.partialorder %v327, 0.0
    %vm342 = vcmp.ge.f32.partialorder %v332, 0.0
    %vm343 = vcmp.ge.f32.partialorder %v337, 0.0
    %v344 = vmul.f32 %v322, 0.1
    %v345 = vmul.f32 %v327, 0.1
    %v346 = vmul.f32 %v332, 0.1
    %v347 = vmul.f32 %v337, 0.1
    %v348 = vsel %vm340, %v322, %v344
    %v349 = vsel %vm341, %v327, %v345
    %v350 = vsel %vm342, %v332, %v346
    %v351 = vsel %vm343, %v337, %v347
    %352 = vset.pattern.permute.xlu0 1
    %353 = vperm.xlu0 %352, %v66
    %v354 = vpop.permute.xlu0 %353
    %356 = vset.pattern.permute.xlu0 1
    %357 = vperm.xlu0 %356, %v67
    %v358 = vpop.permute.xlu0 %357
    %360 = vset.pattern.permute.xlu0 1
    %361 = vperm.xlu0 %360, %v68
    %v362 = vpop.permute.xlu0 %361
    %364 = vset.pattern.permute.xlu0 1
    %365 = vperm.xlu0 %364, %v69
    %v366 = vpop.permute.xlu0 %365
    %v368 = vmul.f32 %v348, %v354
    %v369 = vmul.f32 %v349, %v358
    %v370 = vmul.f32 %v350, %v362
    %v371 = vmul.f32 %v351, %v366
    %372 = vset.pattern.permute.xlu0 2
    %373 = vperm.xlu0 %372, %v66
    %v374 = vpop.permute.xlu0 %373
    %376 = vset.pattern.permute.xlu0 2
    %377 = vperm.xlu0 %376, %v67
    %v378 = vpop.permute.xlu0 %377
    %380 = vset.pattern.permute.xlu0 2
    %381 = vperm.xlu0 %380, %v68
    %v382 = vpop.permute.xlu0 %381
    %384 = vset.pattern.permute.xlu0 2
    %385 = vperm.xlu0 %384, %v69
    %v386 = vpop.permute.xlu0 %385
    %v388 = vadd.f32 %v368, %v374
    %v389 = vadd.f32 %v369, %v378
    %v390 = vadd.f32 %v370, %v382
    %v391 = vadd.f32 %v371, %v386
    %v392 = vld [vmem:[#allocation7] sm:$0xff]
    %v393 = vld [vmem:[#allocation7 + $0x8] sm:$0xff]
    %v394 = vld [vmem:[#allocation7 + $0x10] sm:$0xff]
    %v395 = vld [vmem:[#allocation7 + $0x18] sm:$0xff]
    %v396 = vld [vmem:[#allocation7 + $0x20] sm:$0xff]
    %v397 = vld [vmem:[#allocation7 + $0x28] sm:$0xff]
    %v398 = vld [vmem:[#allocation7 + $0x30] sm:$0xff]
    %v399 = vld [vmem:[#allocation7 + $0x38] sm:$0xff]
    %v400 = vld [vmem:[#allocation7 + $0x40] sm:$0xff]
    %v401 = vld [vmem:[#allocation7 + $0x48] sm:$0xff]
    %v402 = vld [vmem:[#allocation7 + $0x50] sm:$0xff]
    %v403 = vld [vmem:[#allocation7 + $0x58] sm:$0xff]
    %v404 = vld [vmem:[#allocation7 + $0x60] sm:$0xff]
    %v405 = vld [vmem:[#allocation7 + $0x68] sm:$0xff]
    %v406 = vld [vmem:[#allocation7 + $0x70] sm:$0xff]
    %v407 = vld [vmem:[#allocation7 + $0x78] sm:$0xff]
    %s408 = scalar_lea.vmem [#allocation7], 128
    %v409 = vld [vmem:[%s408] sm:$0xff]
    %v410 = vld [vmem:[%s408 + $0x8] sm:$0xff]
    %v411 = vld [vmem:[%s408 + $0x10] sm:$0xff]
    %v412 = vld [vmem:[%s408 + $0x18] sm:$0xff]
    %v413 = vld [vmem:[%s408 + $0x20] sm:$0xff]
    %v414 = vld [vmem:[%s408 + $0x28] sm:$0xff]
    %v415 = vld [vmem:[%s408 + $0x30] sm:$0xff]
    %v416 = vld [vmem:[%s408 + $0x38] sm:$0xff]
    %v417 = vld [vmem:[%s408 + $0x40] sm:$0xff]
    %v418 = vld [vmem:[%s408 + $0x48] sm:$0xff]
    %v419 = vld [vmem:[%s408 + $0x50] sm:$0xff]
    %v420 = vld [vmem:[%s408 + $0x58] sm:$0xff]
    %v421 = vld [vmem:[%s408 + $0x60] sm:$0xff]
    %v422 = vld [vmem:[%s408 + $0x68] sm:$0xff]
    %v423 = vld [vmem:[%s408 + $0x70] sm:$0xff]
    %v424 = vld [vmem:[%s408 + $0x78] sm:$0xff]
    %vm425 = vcmask 523264
    %v427 = vsel %vm425, %v389, 0
    %429 = vmatprep.subr.mxu0 %v410
    %430 = vmatpush1.msra.mxu0 %v409
    %431 = vmatprep.subr.mxu0 %v412
    %432 = vmatpush1.msra.mxu0 %v411
    %433 = vmatprep.subr.mxu0 %v414
    %434 = vmatpush1.msra.mxu0 %v413
    %435 = vmatprep.subr.mxu0 %v416
    %436 = vmatpush1.msra.mxu0 %v415
    %437 = vmatprep.subr.mxu0 %v418
    %438 = vmatpush1.msra.mxu0 %v417
    %439 = vmatprep.subr.mxu0 %v420
    %440 = vmatpush1.msra.mxu0 %v419
    %441 = vmatprep.subr.mxu0 %v422
    %442 = vmatpush1.msra.mxu0 %v421
    %443 = vmatprep.subr.mxu0 %v424
    %444 = vmatpush1.msra.mxu0 %v423
    %445 = vmatprep.subr.mxu0 0.0
    %446 = vmatpush1.msra.mxu0 0.0
    %447 = vmatprep.subr.mxu0 0.0
    %448 = vmatpush1.msra.mxu0 0.0
    %449 = vmatprep.subr.mxu0 0.0
    %450 = vmatpush1.msra.mxu0 0.0
    %451 = vmatprep.subr.mxu0 0.0
    %452 = vmatpush1.msra.mxu0 0.0
    %453 = vmatprep.subr.mxu0 0.0
    %454 = vmatpush1.msra.mxu0 0.0
    %455 = vmatprep.subr.mxu0 0.0
    %456 = vmatpush1.msra.mxu0 0.0
    %457 = vmatprep.subr.mxu0 0.0
    %458 = vmatpush1.msra.mxu0 0.0
    %459 = vmatprep.subr.mxu0 0.0
    %460 = vmatpush1.msra.mxu0 0.0
    %461 = vmatprep.subr.mxu0 0.0
    %462 = vmatpush1.msra.mxu0 0.0
    %463 = vmatprep.subr.mxu0 0.0
    %464 = vmatpush1.msra.mxu0 0.0
    %465 = vmatprep.subr.mxu0 0.0
    %466 = vmatpush1.msra.mxu0 0.0
    %467 = vmatprep.subr.mxu0 0.0
    %468 = vmatpush1.msra.mxu0 0.0
    %469 = vmatprep.subr.mxu0 0.0
    %470 = vmatpush1.msra.mxu0 0.0
    %471 = vmatprep.subr.mxu0 0.0
    %472 = vmatpush1.msra.mxu0 0.0
    %473 = vmatprep.subr.mxu0 0.0
    %474 = vmatpush1.msra.mxu0 0.0
    %475 = vmatprep.subr.mxu0 0.0
    %476 = vmatpush1.msra.mxu0 0.0
    %477 = vmatprep.subr.mxu0 0.0
    %478 = vmatpush1.msra.mxu0 0.0
    %479 = vmatprep.subr.mxu0 0.0
    %480 = vmatpush1.msra.mxu0 0.0
    %481 = vmatprep.subr.mxu0 0.0
    %482 = vmatpush1.msra.mxu0 0.0
    %483 = vmatprep.subr.mxu0 0.0
    %484 = vmatpush1.msra.mxu0 0.0
    %485 = vmatprep.subr.mxu0 0.0
    %486 = vmatpush1.msra.mxu0 0.0
    %487 = vmatprep.subr.mxu0 0.0
    %488 = vmatpush1.msra.mxu0 0.0
    %489 = vmatprep.subr.mxu0 0.0
    %490 = vmatpush1.msra.mxu0 0.0
    %491 = vmatprep.subr.mxu0 0.0
    %492 = vmatpush1.msra.mxu0 0.0
    %493 = vmatprep.mubr.f32.mxu0 0.0
    %494 = vmatmul.mubr.f32.gmra.mrb[0].mxu0 %v427
    %v495 = vpop.f32.mrb[0].mxu0
    %v496 = vadd.f32 0.0, %v495
    %v497 = vpop.f32.mrb[0].mxu0
    %v498 = vadd.f32 0.0, %v497
    %499 = vdwg.mxu0
    %v501 = vsel %vm425, %v388, 0
    %503 = vmatprep.subr.mxu0 %v393
    %504 = vmatpush1.msra.mxu0 %v392
    %505 = vmatprep.subr.mxu0 %v395
    %506 = vmatpush1.msra.mxu0 %v394
    %507 = vmatprep.subr.mxu0 %v397
    %508 = vmatpush1.msra.mxu0 %v396
    %509 = vmatprep.subr.mxu0 %v399
    %510 = vmatpush1.msra.mxu0 %v398
    %511 = vmatprep.subr.mxu0 %v401
    %512 = vmatpush1.msra.mxu0 %v400
    %513 = vmatprep.subr.mxu0 %v403
    %514 = vmatpush1.msra.mxu0 %v402
    %515 = vmatprep.subr.mxu0 %v405
    %516 = vmatpush1.msra.mxu0 %v404
    %517 = vmatprep.subr.mxu0 %v407
    %518 = vmatpush1.msra.mxu0 %v406
    %519 = vmatprep.subr.mxu0 0.0
    %520 = vmatpush1.msra.mxu0 0.0
    %521 = vmatprep.subr.mxu0 0.0
    %522 = vmatpush1.msra.mxu0 0.0
    %523 = vmatprep.subr.mxu0 0.0
    %524 = vmatpush1.msra.mxu0 0.0
    %525 = vmatprep.subr.mxu0 0.0
    %526 = vmatpush1.msra.mxu0 0.0
    %527 = vmatprep.subr.mxu0 0.0
    %528 = vmatpush1.msra.mxu0 0.0
    %529 = vmatprep.subr.mxu0 0.0
    %530 = vmatpush1.msra.mxu0 0.0
    %531 = vmatprep.subr.mxu0 0.0
    %532 = vmatpush1.msra.mxu0 0.0
    %533 = vmatprep.subr.mxu0 0.0
    %534 = vmatpush1.msra.mxu0 0.0
    %535 = vmatprep.subr.mxu0 0.0
    %536 = vmatpush1.msra.mxu0 0.0
    %537 = vmatprep.subr.mxu0 0.0
    %538 = vmatpush1.msra.mxu0 0.0
    %539 = vmatprep.subr.mxu0 0.0
    %540 = vmatpush1.msra.mxu0 0.0
    %541 = vmatprep.subr.mxu0 0.0
    %542 = vmatpush1.msra.mxu0 0.0
    %543 = vmatprep.subr.mxu0 0.0
    %544 = vmatpush1.msra.mxu0 0.0
    %545 = vmatprep.subr.mxu0 0.0
    %546 = vmatpush1.msra.mxu0 0.0
    %547 = vmatprep.subr.mxu0 0.0
    %548 = vmatpush1.msra.mxu0 0.0
    %549 = vmatprep.subr.mxu0 0.0
    %550 = vmatpush1.msra.mxu0 0.0
    %551 = vmatprep.subr.mxu0 0.0
    %552 = vmatpush1.msra.mxu0 0.0
    %553 = vmatprep.subr.mxu0 0.0
    %554 = vmatpush1.msra.mxu0 0.0
    %555 = vmatprep.subr.mxu0 0.0
    %556 = vmatpush1.msra.mxu0 0.0
    %557 = vmatprep.subr.mxu0 0.0
    %558 = vmatpush1.msra.mxu0 0.0
    %559 = vmatprep.subr.mxu0 0.0
    %560 = vmatpush1.msra.mxu0 0.0
    %561 = vmatprep.subr.mxu0 0.0
    %562 = vmatpush1.msra.mxu0 0.0
    %563 = vmatprep.subr.mxu0 0.0
    %564 = vmatpush1.msra.mxu0 0.0
    %565 = vmatprep.subr.mxu0 0.0
    %566 = vmatpush1.msra.mxu0 0.0
    %567 = vmatprep.mubr.f32.mxu0 0.0
    %568 = vmatmul.mubr.f32.gmra.mrb[0].mxu0 %v501
    %v569 = vpop.f32.mrb[0].mxu0
    %v570 = vadd.f32 %v496, %v569
    %v571 = vpop.f32.mrb[0].mxu0
    %v572 = vadd.f32 %v498, %v571
    %573 = vdwg.mxu0
    %s574 = scalar_lea.vmem [#allocation7], 256
    %v575 = vld [vmem:[%s574] sm:$0xff]
    %v576 = vld [vmem:[%s574 + $0x8] sm:$0xff]
    %v577 = vld [vmem:[%s574 + $0x10] sm:$0xff]
    %v578 = vld [vmem:[%s574 + $0x18] sm:$0xff]
    %v579 = vld [vmem:[%s574 + $0x20] sm:$0xff]
    %v580 = vld [vmem:[%s574 + $0x28] sm:$0xff]
    %v581 = vld [vmem:[%s574 + $0x30] sm:$0xff]
    %v582 = vld [vmem:[%s574 + $0x38] sm:$0xff]
    %v583 = vld [vmem:[%s574 + $0x40] sm:$0xff]
    %v584 = vld [vmem:[%s574 + $0x48] sm:$0xff]
    %v585 = vld [vmem:[%s574 + $0x50] sm:$0xff]
    %v586 = vld [vmem:[%s574 + $0x58] sm:$0xff]
    %v587 = vld [vmem:[%s574 + $0x60] sm:$0xff]
    %v588 = vld [vmem:[%s574 + $0x68] sm:$0xff]
    %v589 = vld [vmem:[%s574 + $0x70] sm:$0xff]
    %v590 = vld [vmem:[%s574 + $0x78] sm:$0xff]
    %v592 = vsel %vm425, %v390, 0
    %594 = vmatprep.subr.mxu0 %v576
    %595 = vmatpush1.msra.mxu0 %v575
    %596 = vmatprep.subr.mxu0 %v578
    %597 = vmatpush1.msra.mxu0 %v577
    %598 = vmatprep.subr.mxu0 %v580
    %599 = vmatpush1.msra.mxu0 %v579
    %600 = vmatprep.subr.mxu0 %v582
    %601 = vmatpush1.msra.mxu0 %v581
    %602 = vmatprep.subr.mxu0 %v584
    %603 = vmatpush1.msra.mxu0 %v583
    %604 = vmatprep.subr.mxu0 %v586
    %605 = vmatpush1.msra.mxu0 %v585
    %606 = vmatprep.subr.mxu0 %v588
    %607 = vmatpush1.msra.mxu0 %v587
    %608 = vmatprep.subr.mxu0 %v590
    %609 = vmatpush1.msra.mxu0 %v589
    %610 = vmatprep.subr.mxu0 0.0
    %611 = vmatpush1.msra.mxu0 0.0
    %612 = vmatprep.subr.mxu0 0.0
    %613 = vmatpush1.msra.mxu0 0.0
    %614 = vmatprep.subr.mxu0 0.0
    %615 = vmatpush1.msra.mxu0 0.0
    %616 = vmatprep.subr.mxu0 0.0
    %617 = vmatpush1.msra.mxu0 0.0
    %618 = vmatprep.subr.mxu0 0.0
    %619 = vmatpush1.msra.mxu0 0.0
    %620 = vmatprep.subr.mxu0 0.0
    %621 = vmatpush1.msra.mxu0 0.0
    %622 = vmatprep.subr.mxu0 0.0
    %623 = vmatpush1.msra.mxu0 0.0
    %624 = vmatprep.subr.mxu0 0.0
    %625 = vmatpush1.msra.mxu0 0.0
    %626 = vmatprep.subr.mxu0 0.0
    %627 = vmatpush1.msra.mxu0 0.0
    %628 = vmatprep.subr.mxu0 0.0
    %629 = vmatpush1.msra.mxu0 0.0
    %630 = vmatprep.subr.mxu0 0.0
    %631 = vmatpush1.msra.mxu0 0.0
    %632 = vmatprep.subr.mxu0 0.0
    %633 = vmatpush1.msra.mxu0 0.0
    %634 = vmatprep.subr.mxu0 0.0
    %635 = vmatpush1.msra.mxu0 0.0
    %636 = vmatprep.subr.mxu0 0.0
    %637 = vmatpush1.msra.mxu0 0.0
    %638 = vmatprep.subr.mxu0 0.0
    %639 = vmatpush1.msra.mxu0 0.0
    %640 = vmatprep.subr.mxu0 0.0
    %641 = vmatpush1.msra.mxu0 0.0
    %642 = vmatprep.subr.mxu0 0.0
    %643 = vmatpush1.msra.mxu0 0.0
    %644 = vmatprep.subr.mxu0 0.0
    %645 = vmatpush1.msra.mxu0 0.0
    %646 = vmatprep.subr.mxu0 0.0
    %647 = vmatpush1.msra.mxu0 0.0
    %648 = vmatprep.subr.mxu0 0.0
    %649 = vmatpush1.msra.mxu0 0.0
    %650 = vmatprep.subr.mxu0 0.0
    %651 = vmatpush1.msra.mxu0 0.0
    %652 = vmatprep.subr.mxu0 0.0
    %653 = vmatpush1.msra.mxu0 0.0
    %654 = vmatprep.subr.mxu0 0.0
    %655 = vmatpush1.msra.mxu0 0.0
    %656 = vmatprep.subr.mxu0 0.0
    %657 = vmatpush1.msra.mxu0 0.0
    %658 = vmatprep.mubr.f32.mxu0 0.0
    %659 = vmatmul.mubr.f32.gmra.mrb[0].mxu0 %v592
    %v660 = vpop.f32.mrb[0].mxu0
    %v661 = vadd.f32 0.0, %v660
    %v662 = vpop.f32.mrb[0].mxu0
    %v663 = vadd.f32 0.0, %v662
    %664 = vdwg.mxu0
    %v665 = vadd.f32 %v570, %v661
    %v666 = vadd.f32 %v572, %v663
    %s667 = scalar_lea.vmem [#allocation7], 384
    %v668 = vld [vmem:[%s667] sm:$0xff]
    %v669 = vld [vmem:[%s667 + $0x8] sm:$0xff]
    %v670 = vld [vmem:[%s667 + $0x10] sm:$0xff]
    %v671 = vld [vmem:[%s667 + $0x18] sm:$0xff]
    %v672 = vld [vmem:[%s667 + $0x20] sm:$0xff]
    %v673 = vld [vmem:[%s667 + $0x28] sm:$0xff]
    %v674 = vld [vmem:[%s667 + $0x30] sm:$0xff]
    %v675 = vld [vmem:[%s667 + $0x38] sm:$0xff]
    %v676 = vld [vmem:[%s667 + $0x40] sm:$0xff]
    %v677 = vld [vmem:[%s667 + $0x48] sm:$0xff]
    %v678 = vld [vmem:[%s667 + $0x50] sm:$0xff]
    %v679 = vld [vmem:[%s667 + $0x58] sm:$0xff]
    %v680 = vld [vmem:[%s667 + $0x60] sm:$0xff]
    %v681 = vld [vmem:[%s667 + $0x68] sm:$0xff]
    %v682 = vld [vmem:[%s667 + $0x70] sm:$0xff]
    %v683 = vld [vmem:[%s667 + $0x78] sm:$0xff]
    %v685 = vsel %vm425, %v391, 0
    %687 = vmatprep.subr.mxu0 %v669
    %688 = vmatpush1.msra.mxu0 %v668
    %689 = vmatprep.subr.mxu0 %v671
    %690 = vmatpush1.msra.mxu0 %v670
    %691 = vmatprep.subr.mxu0 %v673
    %692 = vmatpush1.msra.mxu0 %v672
    %693 = vmatprep.subr.mxu0 %v675
    %694 = vmatpush1.msra.mxu0 %v674
    %695 = vmatprep.subr.mxu0 %v677
    %696 = vmatpush1.msra.mxu0 %v676
    %697 = vmatprep.subr.mxu0 %v679
    %698 = vmatpush1.msra.mxu0 %v678
    %699 = vmatprep.subr.mxu0 %v681
    %700 = vmatpush1.msra.mxu0 %v680
    %701 = vmatprep.subr.mxu0 %v683
    %702 = vmatpush1.msra.mxu0 %v682
    %703 = vmatprep.subr.mxu0 0.0
    %704 = vmatpush1.msra.mxu0 0.0
    %705 = vmatprep.subr.mxu0 0.0
    %706 = vmatpush1.msra.mxu0 0.0
    %707 = vmatprep.subr.mxu0 0.0
    %708 = vmatpush1.msra.mxu0 0.0
    %709 = vmatprep.subr.mxu0 0.0
    %710 = vmatpush1.msra.mxu0 0.0
    %711 = vmatprep.subr.mxu0 0.0
    %712 = vmatpush1.msra.mxu0 0.0
    %713 = vmatprep.subr.mxu0 0.0
    %714 = vmatpush1.msra.mxu0 0.0
    %715 = vmatprep.subr.mxu0 0.0
    %716 = vmatpush1.msra.mxu0 0.0
    %717 = vmatprep.subr.mxu0 0.0
    %718 = vmatpush1.msra.mxu0 0.0
    %719 = vmatprep.subr.mxu0 0.0
    %720 = vmatpush1.msra.mxu0 0.0
    %721 = vmatprep.subr.mxu0 0.0
    %722 = vmatpush1.msra.mxu0 0.0
    %723 = vmatprep.subr.mxu0 0.0
    %724 = vmatpush1.msra.mxu0 0.0
    %725 = vmatprep.subr.mxu0 0.0
    %726 = vmatpush1.msra.mxu0 0.0
    %727 = vmatprep.subr.mxu0 0.0
    %728 = vmatpush1.msra.mxu0 0.0
    %729 = vmatprep.subr.mxu0 0.0
    %730 = vmatpush1.msra.mxu0 0.0
    %731 = vmatprep.subr.mxu0 0.0
    %732 = vmatpush1.msra.mxu0 0.0
    %733 = vmatprep.subr.mxu0 0.0
    %734 = vmatpush1.msra.mxu0 0.0
    %735 = vmatprep.subr.mxu0 0.0
    %736 = vmatpush1.msra.mxu0 0.0
    %737 = vmatprep.subr.mxu0 0.0
    %738 = vmatpush1.msra.mxu0 0.0
    %739 = vmatprep.subr.mxu0 0.0
    %740 = vmatpush1.msra.mxu0 0.0
    %741 = vmatprep.subr.mxu0 0.0
    %742 = vmatpush1.msra.mxu0 0.0
    %743 = vmatprep.subr.mxu0 0.0
    %744 = vmatpush1.msra.mxu0 0.0
    %745 = vmatprep.subr.mxu0 0.0
    %746 = vmatpush1.msra.mxu0 0.0
    %747 = vmatprep.subr.mxu0 0.0
    %748 = vmatpush1.msra.mxu0 0.0
    %749 = vmatprep.subr.mxu0 0.0
    %750 = vmatpush1.msra.mxu0 0.0
    %751 = vmatprep.mubr.f32.mxu0 0.0
    %752 = vmatmul.mubr.f32.gmra.mrb[0].mxu0 %v685
    %v753 = vpop.f32.mrb[0].mxu0
    %v754 = vadd.f32 0.0, %v753
    %v755 = vpop.f32.mrb[0].mxu0
    %v756 = vadd.f32 0.0, %v755
    %757 = vdwg.mxu0
    %v758 = vadd.f32 %v665, %v754
    %v759 = vadd.f32 %v666, %v756
    %760 = vst [vmem:[#allocation8] sm:$0xff] %v758
    %761 = vst [vmem:[#allocation8 + $0x8] sm:$0xff] %v759
    %s762 = scalar_lea.vmem [#allocation2], 4
    %v763 = vld [vmem:[%s762] sm:$0xf]
    %765 = vrot.lane.b32.xlu0 %v763, 16
    %v766 = vpop.permute.xlu0 %765
    %v768 = vsel %vm77, 0.0, %v766
    %v769 = vsel %vm79, %v768, 0.0
    %v770 = vmul.f32 %v769, %v87
    %v771 = vmul.f32 %v769, %v96
    %v772 = vmul.f32 %v769, %v105
    %v773 = vmul.f32 %v769, %v114
    %v774 = vmul.f32 %v769, %v123
    %v775 = vmul.f32 %v769, %v132
    %v776 = vmul.f32 %v769, %v141
    %v777 = vmul.f32 %v769, %v150
    %v778 = vmul.f32 %v769, %v159
    %v780 = vrot.slane %v771, 4
    %781 = vrot.lane.b32.xlu0 %v780, 127
    %v782 = vpop.permute.xlu0 %781
    %785 = vrot.lane.b32.xlu0 %v772, 126
    %v786 = vpop.permute.xlu0 %785
    %v789 = vrot.slane %v773, 4
    %790 = vrot.lane.b32.xlu0 %v789, 120
    %v791 = vpop.permute.xlu0 %790
    %794 = vrot.lane.b32.xlu0 %v774, 119
    %v795 = vpop.permute.xlu0 %794
    %v798 = vrot.slane %v775, 4
    %799 = vrot.lane.b32.xlu0 %v798, 118
    %v800 = vpop.permute.xlu0 %799
    %803 = vrot.lane.b32.xlu0 %v776, 112
    %v804 = vpop.permute.xlu0 %803
    %v807 = vrot.slane %v777, 4
    %808 = vrot.lane.b32.xlu0 %v807, 111
    %v809 = vpop.permute.xlu0 %808
    %812 = vrot.lane.b32.xlu0 %v778, 110
    %v813 = vpop.permute.xlu0 %812
    %v814 = vsel %vm197, %v770, %v782
    %v815 = vsel %vm197, %v786, %v791
    %v816 = vsel %vm197, %v795, %v800
    %v817 = vsel %vm197, %v804, %v809
    %822 = vrot.lane.b32.xlu0 %v814, 121
    %v823 = vpop.permute.xlu0 %822
    %824 = vrot.lane.b32.xlu0 %v815, 121
    %v825 = vpop.permute.xlu0 %824
    %826 = vrot.lane.b32.xlu0 %v816, 121
    %v827 = vpop.permute.xlu0 %826
    %828 = vrot.lane.b32.xlu0 %v817, 121
    %v829 = vpop.permute.xlu0 %828
    %830 = vrot.lane.b32.xlu0 %v813, 121
    %v831 = vpop.permute.xlu0 %830
    %v836 = vsel %vm197, %v831, 0
    %838 = vmatprep.subr.mxu0 0.0
    %839 = vmatpush1.msra.mxu0 %v823
    %840 = vmatprep.subr.mxu0 0.0
    %841 = vmatpush1.msra.mxu0 %v825
    %842 = vmatprep.subr.mxu0 0.0
    %843 = vmatpush1.msra.mxu0 %v827
    %844 = vmatprep.subr.mxu0 0.0
    %845 = vmatpush1.msra.mxu0 %v829
    %846 = vmatprep.subr.mxu0 0.0
    %847 = vmatpush1.msra.mxu0 %v836
    %848 = vmatprep.subr.mxu0 0.0
    %849 = vmatpush1.msra.mxu0 0.0
    %850 = vmatprep.subr.mxu0 0.0
    %851 = vmatpush1.msra.mxu0 0.0
    %852 = vmatprep.subr.mxu0 0.0
    %853 = vmatpush1.msra.mxu0 0.0
    %854 = vmatprep.subr.mxu0 0.0
    %855 = vmatpush1.msra.mxu0 0.0
    %856 = vmatprep.subr.mxu0 0.0
    %857 = vmatpush1.msra.mxu0 0.0
    %858 = vmatprep.subr.mxu0 0.0
    %859 = vmatpush1.msra.mxu0 0.0
    %860 = vmatprep.subr.mxu0 0.0
    %861 = vmatpush1.msra.mxu0 0.0
    %862 = vmatprep.subr.mxu0 0.0
    %863 = vmatpush1.msra.mxu0 0.0
    %864 = vmatprep.subr.mxu0 0.0
    %865 = vmatpush1.msra.mxu0 0.0
    %866 = vmatprep.subr.mxu0 0.0
    %867 = vmatpush1.msra.mxu0 0.0
    %868 = vmatprep.subr.mxu0 0.0
    %869 = vmatpush1.msra.mxu0 0.0
    %870 = vmatprep.subr.mxu0 0.0
    %871 = vmatpush1.msra.mxu0 0.0
    %872 = vmatprep.subr.mxu0 0.0
    %873 = vmatpush1.msra.mxu0 0.0
    %874 = vmatprep.subr.mxu0 0.0
    %875 = vmatpush1.msra.mxu0 0.0
    %876 = vmatprep.subr.mxu0 0.0
    %877 = vmatpush1.msra.mxu0 0.0
    %878 = vmatprep.subr.mxu0 0.0
    %879 = vmatpush1.msra.mxu0 0.0
    %880 = vmatprep.subr.mxu0 0.0
    %881 = vmatpush1.msra.mxu0 0.0
    %882 = vmatprep.subr.mxu0 0.0
    %883 = vmatpush1.msra.mxu0 0.0
    %884 = vmatprep.subr.mxu0 0.0
    %885 = vmatpush1.msra.mxu0 0.0
    %886 = vmatprep.subr.mxu0 0.0
    %887 = vmatpush1.msra.mxu0 0.0
    %888 = vmatprep.subr.mxu0 0.0
    %889 = vmatpush1.msra.mxu0 0.0
    %890 = vmatprep.subr.mxu0 0.0
    %891 = vmatpush1.msra.mxu0 0.0
    %892 = vmatprep.subr.mxu0 0.0
    %893 = vmatpush1.msra.mxu0 0.0
    %894 = vmatprep.subr.mxu0 0.0
    %895 = vmatpush1.msra.mxu0 0.0
    %896 = vmatprep.subr.mxu0 0.0
    %897 = vmatpush1.msra.mxu0 0.0
    %898 = vmatprep.subr.mxu0 0.0
    %899 = vmatpush1.msra.mxu0 0.0
    %900 = vmatprep.subr.mxu0 0.0
    %901 = vmatpush1.msra.mxu0 0.0
    %902 = vmatprep.mubr.f32.mxu0 0.0
    %903 = vmatmul.mubr.f32.gmra.mrb[0].mxu0 %v242
    %v904 = vpop.f32.mrb[0].mxu0
    %v905 = vadd.f32 %v205, %v904
    %v906 = vpop.f32.mrb[0].mxu0
    %907 = vmatprep.mubr.f32.mxu0 0.0
    %908 = vmatmul.mubr.f32.gmra.mrb[0].mxu0 %v245
    %v909 = vpop.f32.mrb[0].mxu0
    %v910 = vadd.f32 %v210, %v909
    %v911 = vpop.f32.mrb[0].mxu0
    %912 = vmatprep.mubr.f32.mxu0 0.0
    %913 = vmatmul.mubr.f32.gmra.mrb[0].mxu0 %v248
    %v914 = vpop.f32.mrb[0].mxu0
    %v915 = vadd.f32 %v215, %v914
    %v916 = vpop.f32.mrb[0].mxu0
    %917 = vmatprep.mubr.f32.mxu0 0.0
    %918 = vmatmul.mubr.f32.gmra.mrb[0].mxu0 %v251
    %v919 = vpop.f32.mrb[0].mxu0
    %v920 = vadd.f32 %v220, %v919
    %v921 = vpop.f32.mrb[0].mxu0
    %922 = vdwg.mxu0
    %vm923 = vcmp.ge.f32.partialorder %v905, 0.0
    %vm924 = vcmp.ge.f32.partialorder %v910, 0.0
    %vm925 = vcmp.ge.f32.partialorder %v915, 0.0
    %vm926 = vcmp.ge.f32.partialorder %v920, 0.0
    %v927 = vmul.f32 %v905, 0.1
    %v928 = vmul.f32 %v910, 0.1
    %v929 = vmul.f32 %v915, 0.1
    %v930 = vmul.f32 %v920, 0.1
    %v931 = vsel %vm923, %v905, %v927
    %v932 = vsel %vm924, %v910, %v928
    %v933 = vsel %vm925, %v915, %v929
    %v934 = vsel %vm926, %v920, %v930
    %v935 = vmul.f32 %v931, %v354
    %v936 = vmul.f32 %v932, %v358
    %v937 = vmul.f32 %v933, %v362
    %v938 = vmul.f32 %v934, %v366
    %v939 = vadd.f32 %v935, %v374
    %v940 = vadd.f32 %v936, %v378
    %v941 = vadd.f32 %v937, %v382
    %v942 = vadd.f32 %v938, %v386
    %v943 = vld [vmem:[#allocation7] sm:$0xff]
    %v944 = vld [vmem:[#allocation7 + $0x8] sm:$0xff]
    %v945 = vld [vmem:[#allocation7 + $0x10] sm:$0xff]
    %v946 = vld [vmem:[#allocation7 + $0x18] sm:$0xff]
    %v947 = vld [vmem:[#allocation7 + $0x20] sm:$0xff]
    %v948 = vld [vmem:[#allocation7 + $0x28] sm:$0xff]
    %v949 = vld [vmem:[#allocation7 + $0x30] sm:$0xff]
    %v950 = vld [vmem:[#allocation7 + $0x38] sm:$0xff]
    %v951 = vld [vmem:[#allocation7 + $0x40] sm:$0xff]
    %v952 = vld [vmem:[#allocation7 + $0x48] sm:$0xff]
    %v953 = vld [vmem:[#allocation7 + $0x50] sm:$0xff]
    %v954 = vld [vmem:[#allocation7 + $0x58] sm:$0xff]
    %v955 = vld [vmem:[#allocation7 + $0x60] sm:$0xff]
    %v956 = vld [vmem:[#allocation7 + $0x68] sm:$0xff]
    %v957 = vld [vmem:[#allocation7 + $0x70] sm:$0xff]
    %v958 = vld [vmem:[#allocation7 + $0x78] sm:$0xff]
    %v959 = vld [vmem:[%s408] sm:$0xff]
    %v960 = vld [vmem:[%s408 + $0x8] sm:$0xff]
    %v961 = vld [vmem:[%s408 + $0x10] sm:$0xff]
    %v962 = vld [vmem:[%s408 + $0x18] sm:$0xff]
    %v963 = vld [vmem:[%s408 + $0x20] sm:$0xff]
    %v964 = vld [vmem:[%s408 + $0x28] sm:$0xff]
    %v965 = vld [vmem:[%s408 + $0x30] sm:$0xff]
    %v966 = vld [vmem:[%s408 + $0x38] sm:$0xff]
    %v967 = vld [vmem:[%s408 + $0x40] sm:$0xff]
    %v968 = vld [vmem:[%s408 + $0x48] sm:$0xff]
    %v969 = vld [vmem:[%s408 + $0x50] sm:$0xff]
    %v970 = vld [vmem:[%s408 + $0x58] sm:$0xff]
    %v971 = vld [vmem:[%s408 + $0x60] sm:$0xff]
    %v972 = vld [vmem:[%s408 + $0x68] sm:$0xff]
    %v973 = vld [vmem:[%s408 + $0x70] sm:$0xff]
    %v974 = vld [vmem:[%s408 + $0x78] sm:$0xff]
    %v976 = vsel %vm425, %v940, 0
    %978 = vmatprep.subr.mxu0 %v960
    %979 = vmatpush1.msra.mxu0 %v959
    %980 = vmatprep.subr.mxu0 %v962
    %981 = vmatpush1.msra.mxu0 %v961
    %982 = vmatprep.subr.mxu0 %v964
    %983 = vmatpush1.msra.mxu0 %v963
    %984 = vmatprep.subr.mxu0 %v966
    %985 = vmatpush1.msra.mxu0 %v965
    %986 = vmatprep.subr.mxu0 %v968
    %987 = vmatpush1.msra.mxu0 %v967
    %988 = vmatprep.subr.mxu0 %v970
    %989 = vmatpush1.msra.mxu0 %v969
    %990 = vmatprep.subr.mxu0 %v972
    %991 = vmatpush1.msra.mxu0 %v971
    %992 = vmatprep.subr.mxu0 %v974
    %993 = vmatpush1.msra.mxu0 %v973
    %994 = vmatprep.subr.mxu0 0.0
    %995 = vmatpush1.msra.mxu0 0.0
    %996 = vmatprep.subr.mxu0 0.0
    %997 = vmatpush1.msra.mxu0 0.0
    %998 = vmatprep.subr.mxu0 0.0
    %999 = vmatpush1.msra.mxu0 0.0
    %1000 = vmatprep.subr.mxu0 0.0
    %1001 = vmatpush1.msra.mxu0 0.0
    %1002 = vmatprep.subr.mxu0 0.0
    %1003 = vmatpush1.msra.mxu0 0.0
    %1004 = vmatprep.subr.mxu0 0.0
    %1005 = vmatpush1.msra.mxu0 0.0
    %1006 = vmatprep.subr.mxu0 0.0
    %1007 = vmatpush1.msra.mxu0 0.0
    %1008 = vmatprep.subr.mxu0 0.0
    %1009 = vmatpush1.msra.mxu0 0.0
    %1010 = vmatprep.subr.mxu0 0.0
    %1011 = vmatpush1.msra.mxu0 0.0
    %1012 = vmatprep.subr.mxu0 0.0
    %1013 = vmatpush1.msra.mxu0 0.0
    %1014 = vmatprep.subr.mxu0 0.0
    %1015 = vmatpush1.msra.mxu0 0.0
    %1016 = vmatprep.subr.mxu0 0.0
    %1017 = vmatpush1.msra.mxu0 0.0
    %1018 = vmatprep.subr.mxu0 0.0
    %1019 = vmatpush1.msra.mxu0 0.0
    %1020 = vmatprep.subr.mxu0 0.0
    %1021 = vmatpush1.msra.mxu0 0.0
    %1022 = vmatprep.subr.mxu0 0.0
    %1023 = vmatpush1.msra.mxu0 0.0
    %1024 = vmatprep.subr.mxu0 0.0
    %1025 = vmatpush1.msra.mxu0 0.0
    %1026 = vmatprep.subr.mxu0 0.0
    %1027 = vmatpush1.msra.mxu0 0.0
    %1028 = vmatprep.subr.mxu0 0.0
    %1029 = vmatpush1.msra.mxu0 0.0
    %1030 = vmatprep.subr.mxu0 0.0
    %1031 = vmatpush1.msra.mxu0 0.0
    %1032 = vmatprep.subr.mxu0 0.0
    %1033 = vmatpush1.msra.mxu0 0.0
    %1034 = vmatprep.subr.mxu0 0.0
    %1035 = vmatpush1.msra.mxu0 0.0
    %1036 = vmatprep.subr.mxu0 0.0
    %1037 = vmatpush1.msra.mxu0 0.0
    %1038 = vmatprep.subr.mxu0 0.0
    %1039 = vmatpush1.msra.mxu0 0.0
    %1040 = vmatprep.subr.mxu0 0.0
    %1041 = vmatpush1.msra.mxu0 0.0
    %1042 = vmatprep.mubr.f32.mxu0 0.0
    %1043 = vmatmul.mubr.f32.gmra.mrb[0].mxu0 %v976
    %v1044 = vpop.f32.mrb[0].mxu0
    %v1045 = vadd.f32 0.0, %v1044
    %v1046 = vpop.f32.mrb[0].mxu0
    %v1047 = vadd.f32 0.0, %v1046
    %1048 = vdwg.mxu0
    %v1050 = vsel %vm425, %v939, 0
    %1052 = vmatprep.subr.mxu0 %v944
    %1053 = vmatpush1.msra.mxu0 %v943
    %1054 = vmatprep.subr.mxu0 %v946
    %1055 = vmatpush1.msra.mxu0 %v945
    %1056 = vmatprep.subr.mxu0 %v948
    %1057 = vmatpush1.msra.mxu0 %v947
    %1058 = vmatprep.subr.mxu0 %v950
    %1059 = vmatpush1.msra.mxu0 %v949
    %1060 = vmatprep.subr.mxu0 %v952
    %1061 = vmatpush1.msra.mxu0 %v951
    %1062 = vmatprep.subr.mxu0 %v954
    %1063 = vmatpush1.msra.mxu0 %v953
    %1064 = vmatprep.subr.mxu0 %v956
    %1065 = vmatpush1.msra.mxu0 %v955
    %1066 = vmatprep.subr.mxu0 %v958
    %1067 = vmatpush1.msra.mxu0 %v957
    %1068 = vmatprep.subr.mxu0 0.0
    %1069 = vmatpush1.msra.mxu0 0.0
    %1070 = vmatprep.subr.mxu0 0.0
    %1071 = vmatpush1.msra.mxu0 0.0
    %1072 = vmatprep.subr.mxu0 0.0
    %1073 = vmatpush1.msra.mxu0 0.0
    %1074 = vmatprep.subr.mxu0 0.0
    %1075 = vmatpush1.msra.mxu0 0.0
    %1076 = vmatprep.subr.mxu0 0.0
    %1077 = vmatpush1.msra.mxu0 0.0
    %1078 = vmatprep.subr.mxu0 0.0
    %1079 = vmatpush1.msra.mxu0 0.0
    %1080 = vmatprep.subr.mxu0 0.0
    %1081 = vmatpush1.msra.mxu0 0.0
    %1082 = vmatprep.subr.mxu0 0.0
    %1083 = vmatpush1.msra.mxu0 0.0
    %1084 = vmatprep.subr.mxu0 0.0
    %1085 = vmatpush1.msra.mxu0 0.0
    %1086 = vmatprep.subr.mxu0 0.0
    %1087 = vmatpush1.msra.mxu0 0.0
    %1088 = vmatprep.subr.mxu0 0.0
    %1089 = vmatpush1.msra.mxu0 0.0
    %1090 = vmatprep.subr.mxu0 0.0
    %1091 = vmatpush1.msra.mxu0 0.0
    %1092 = vmatprep.subr.mxu0 0.0
    %1093 = vmatpush1.msra.mxu0 0.0
    %1094 = vmatprep.subr.mxu0 0.0
    %1095 = vmatpush1.msra.mxu0 0.0
    %1096 = vmatprep.subr.mxu0 0.0
    %1097 = vmatpush1.msra.mxu0 0.0
    %1098 = vmatprep.subr.mxu0 0.0
    %1099 = vmatpush1.msra.mxu0 0.0
    %1100 = vmatprep.subr.mxu0 0.0
    %1101 = vmatpush1.msra.mxu0 0.0
    %1102 = vmatprep.subr.mxu0 0.0
    %1103 = vmatpush1.msra.mxu0 0.0
    %1104 = vmatprep.subr.mxu0 0.0
    %1105 = vmatpush1.msra.mxu0 0.0
    %1106 = vmatprep.subr.mxu0 0.0
    %1107 = vmatpush1.msra.mxu0 0.0
    %1108 = vmatprep.subr.mxu0 0.0
    %1109 = vmatpush1.msra.mxu0 0.0
    %1110 = vmatprep.subr.mxu0 0.0
    %1111 = vmatpush1.msra.mxu0 0.0
    %1112 = vmatprep.subr.mxu0 0.0
    %1113 = vmatpush1.msra.mxu0 0.0
    %1114 = vmatprep.subr.mxu0 0.0
    %1115 = vmatpush1.msra.mxu0 0.0
    %1116 = vmatprep.mubr.f32.mxu0 0.0
    %1117 = vmatmul.mubr.f32.gmra.mrb[0].mxu0 %v1050
    %v1118 = vpop.f32.mrb[0].mxu0
    %v1119 = vadd.f32 %v1045, %v1118
    %v1120 = vpop.f32.mrb[0].mxu0
    %v1121 = vadd.f32 %v1047, %v1120
    %1122 = vdwg.mxu0
    %v1123 = vld [vmem:[%s574] sm:$0xff]
    %v1124 = vld [vmem:[%s574 + $0x8] sm:$0xff]
    %v1125 = vld [vmem:[%s574 + $0x10] sm:$0xff]
    %v1126 = vld [vmem:[%s574 + $0x18] sm:$0xff]
    %v1127 = vld [vmem:[%s574 + $0x20] sm:$0xff]
    %v1128 = vld [vmem:[%s574 + $0x28] sm:$0xff]
    %v1129 = vld [vmem:[%s574 + $0x30] sm:$0xff]
    %v1130 = vld [vmem:[%s574 + $0x38] sm:$0xff]
    %v1131 = vld [vmem:[%s574 + $0x40] sm:$0xff]
    %v1132 = vld [vmem:[%s574 + $0x48] sm:$0xff]
    %v1133 = vld [vmem:[%s574 + $0x50] sm:$0xff]
    %v1134 = vld [vmem:[%s574 + $0x58] sm:$0xff]
    %v1135 = vld [vmem:[%s574 + $0x60] sm:$0xff]
    %v1136 = vld [vmem:[%s574 + $0x68] sm:$0xff]
    %v1137 = vld [vmem:[%s574 + $0x70] sm:$0xff]
    %v1138 = vld [vmem:[%s574 + $0x78] sm:$0xff]
    %v1140 = vsel %vm425, %v941, 0
    %1142 = vmatprep.subr.mxu0 %v1124
    %1143 = vmatpush1.msra.mxu0 %v1123
    %1144 = vmatprep.subr.mxu0 %v1126
    %1145 = vmatpush1.msra.mxu0 %v1125
    %1146 = vmatprep.subr.mxu0 %v1128
    %1147 = vmatpush1.msra.mxu0 %v1127
    %1148 = vmatprep.subr.mxu0 %v1130
    %1149 = vmatpush1.msra.mxu0 %v1129
    %1150 = vmatprep.subr.mxu0 %v1132
    %1151 = vmatpush1.msra.mxu0 %v1131
    %1152 = vmatprep.subr.mxu0 %v1134
    %1153 = vmatpush1.msra.mxu0 %v1133
    %1154 = vmatprep.subr.mxu0 %v1136
    %1155 = vmatpush1.msra.mxu0 %v1135
    %1156 = vmatprep.subr.mxu0 %v1138
    %1157 = vmatpush1.msra.mxu0 %v1137
    %1158 = vmatprep.subr.mxu0 0.0
    %1159 = vmatpush1.msra.mxu0 0.0
    %1160 = vmatprep.subr.mxu0 0.0
    %1161 = vmatpush1.msra.mxu0 0.0
    %1162 = vmatprep.subr.mxu0 0.0
    %1163 = vmatpush1.msra.mxu0 0.0
    %1164 = vmatprep.subr.mxu0 0.0
    %1165 = vmatpush1.msra.mxu0 0.0
    %1166 = vmatprep.subr.mxu0 0.0
    %1167 = vmatpush1.msra.mxu0 0.0
    %1168 = vmatprep.subr.mxu0 0.0
    %1169 = vmatpush1.msra.mxu0 0.0
    %1170 = vmatprep.subr.mxu0 0.0
    %1171 = vmatpush1.msra.mxu0 0.0
    %1172 = vmatprep.subr.mxu0 0.0
    %1173 = vmatpush1.msra.mxu0 0.0
    %1174 = vmatprep.subr.mxu0 0.0
    %1175 = vmatpush1.msra.mxu0 0.0
    %1176 = vmatprep.subr.mxu0 0.0
    %1177 = vmatpush1.msra.mxu0 0.0
    %1178 = vmatprep.subr.mxu0 0.0
    %1179 = vmatpush1.msra.mxu0 0.0
    %1180 = vmatprep.subr.mxu0 0.0
    %1181 = vmatpush1.msra.mxu0 0.0
    %1182 = vmatprep.subr.mxu0 0.0
    %1183 = vmatpush1.msra.mxu0 0.0
    %1184 = vmatprep.subr.mxu0 0.0
    %1185 = vmatpush1.msra.mxu0 0.0
    %1186 = vmatprep.subr.mxu0 0.0
    %1187 = vmatpush1.msra.mxu0 0.0
    %1188 = vmatprep.subr.mxu0 0.0
    %1189 = vmatpush1.msra.mxu0 0.0
    %1190 = vmatprep.subr.mxu0 0.0
    %1191 = vmatpush1.msra.mxu0 0.0
    %1192 = vmatprep.subr.mxu0 0.0
    %1193 = vmatpush1.msra.mxu0 0.0
    %1194 = vmatprep.subr.mxu0 0.0
    %1195 = vmatpush1.msra.mxu0 0.0
    %1196 = vmatprep.subr.mxu0 0.0
    %1197 = vmatpush1.msra.mxu0 0.0
    %1198 = vmatprep.subr.mxu0 0.0
    %1199 = vmatpush1.msra.mxu0 0.0
    %1200 = vmatprep.subr.mxu0 0.0
    %1201 = vmatpush1.msra.mxu0 0.0
    %1202 = vmatprep.subr.mxu0 0.0
    %1203 = vmatpush1.msra.mxu0 0.0
    %1204 = vmatprep.subr.mxu0 0.0
    %1205 = vmatpush1.msra.mxu0 0.0
    %1206 = vmatprep.mubr.f32.mxu0 0.0
    %1207 = vmatmul.mubr.f32.gmra.mrb[0].mxu0 %v1140
    %v1208 = vpop.f32.mrb[0].mxu0
    %v1209 = vadd.f32 0.0, %v1208
    %v1210 = vpop.f32.mrb[0].mxu0
    %v1211 = vadd.f32 0.0, %v1210
    %1212 = vdwg.mxu0
    %v1213 = vadd.f32 %v1119, %v1209
    %v1214 = vadd.f32 %v1121, %v1211
    %v1215 = vld [vmem:[%s667] sm:$0xff]
    %v1216 = vld [vmem:[%s667 + $0x8] sm:$0xff]
    %v1217 = vld [vmem:[%s667 + $0x10] sm:$0xff]
    %v1218 = vld [vmem:[%s667 + $0x18] sm:$0xff]
    %v1219 = vld [vmem:[%s667 + $0x20] sm:$0xff]
    %v1220 = vld [vmem:[%s667 + $0x28] sm:$0xff]
    %v1221 = vld [vmem:[%s667 + $0x30] sm:$0xff]
    %v1222 = vld [vmem:[%s667 + $0x38] sm:$0xff]
    %v1223 = vld [vmem:[%s667 + $0x40] sm:$0xff]
    %v1224 = vld [vmem:[%s667 + $0x48] sm:$0xff]
    %v1225 = vld [vmem:[%s667 + $0x50] sm:$0xff]
    %v1226 = vld [vmem:[%s667 + $0x58] sm:$0xff]
    %v1227 = vld [vmem:[%s667 + $0x60] sm:$0xff]
    %v1228 = vld [vmem:[%s667 + $0x68] sm:$0xff]
    %v1229 = vld [vmem:[%s667 + $0x70] sm:$0xff]
    %v1230 = vld [vmem:[%s667 + $0x78] sm:$0xff]
    %v1232 = vsel %vm425, %v942, 0
    %1234 = vmatprep.subr.mxu0 %v1216
    %1235 = vmatpush1.msra.mxu0 %v1215
    %1236 = vmatprep.subr.mxu0 %v1218
    %1237 = vmatpush1.msra.mxu0 %v1217
    %1238 = vmatprep.subr.mxu0 %v1220
    %1239 = vmatpush1.msra.mxu0 %v1219
    %1240 = vmatprep.subr.mxu0 %v1222
    %1241 = vmatpush1.msra.mxu0 %v1221
    %1242 = vmatprep.subr.mxu0 %v1224
    %1243 = vmatpush1.msra.mxu0 %v1223
    %1244 = vmatprep.subr.mxu0 %v1226
    %1245 = vmatpush1.msra.mxu0 %v1225
    %1246 = vmatprep.subr.mxu0 %v1228
    %1247 = vmatpush1.msra.mxu0 %v1227
    %1248 = vmatprep.subr.mxu0 %v1230
    %1249 = vmatpush1.msra.mxu0 %v1229
    %1250 = vmatprep.subr.mxu0 0.0
    %1251 = vmatpush1.msra.mxu0 0.0
    %1252 = vmatprep.subr.mxu0 0.0
    %1253 = vmatpush1.msra.mxu0 0.0
    %1254 = vmatprep.subr.mxu0 0.0
    %1255 = vmatpush1.msra.mxu0 0.0
    %1256 = vmatprep.subr.mxu0 0.0
    %1257 = vmatpush1.msra.mxu0 0.0
    %1258 = vmatprep.subr.mxu0 0.0
    %1259 = vmatpush1.msra.mxu0 0.0
    %1260 = vmatprep.subr.mxu0 0.0
    %1261 = vmatpush1.msra.mxu0 0.0
    %1262 = vmatprep.subr.mxu0 0.0
    %1263 = vmatpush1.msra.mxu0 0.0
    %1264 = vmatprep.subr.mxu0 0.0
    %1265 = vmatpush1.msra.mxu0 0.0
    %1266 = vmatprep.subr.mxu0 0.0
    %1267 = vmatpush1.msra.mxu0 0.0
    %1268 = vmatprep.subr.mxu0 0.0
    %1269 = vmatpush1.msra.mxu0 0.0
    %1270 = vmatprep.subr.mxu0 0.0
    %1271 = vmatpush1.msra.mxu0 0.0
    %1272 = vmatprep.subr.mxu0 0.0
    %1273 = vmatpush1.msra.mxu0 0.0
    %1274 = vmatprep.subr.mxu0 0.0
    %1275 = vmatpush1.msra.mxu0 0.0
    %1276 = vmatprep.subr.mxu0 0.0
    %1277 = vmatpush1.msra.mxu0 0.0
    %1278 = vmatprep.subr.mxu0 0.0
    %1279 = vmatpush1.msra.mxu0 0.0
    %1280 = vmatprep.subr.mxu0 0.0
    %1281 = vmatpush1.msra.mxu0 0.0
    %1282 = vmatprep.subr.mxu0 0.0
    %1283 = vmatpush1.msra.mxu0 0.0
    %1284 = vmatprep.subr.mxu0 0.0
    %1285 = vmatpush1.msra.mxu0 0.0
    %1286 = vmatprep.subr.mxu0 0.0
    %1287 = vmatpush1.msra.mxu0 0.0
    %1288 = vmatprep.subr.mxu0 0.0
    %1289 = vmatpush1.msra.mxu0 0.0
    %1290 = vmatprep.subr.mxu0 0.0
    %1291 = vmatpush1.msra.mxu0 0.0
    %1292 = vmatprep.subr.mxu0 0.0
    %1293 = vmatpush1.msra.mxu0 0.0
    %1294 = vmatprep.subr.mxu0 0.0
    %1295 = vmatpush1.msra.mxu0 0.0
    %1296 = vmatprep.subr.mxu0 0.0
    %1297 = vmatpush1.msra.mxu0 0.0
    %1298 = vmatprep.mubr.f32.mxu0 0.0
    %1299 = vmatmul.mubr.f32.gmra.mrb[0].mxu0 %v1232
    %v1300 = vpop.f32.mrb[0].mxu0
    %v1301 = vadd.f32 0.0, %v1300
    %v1302 = vpop.f32.mrb[0].mxu0
    %v1303 = vadd.f32 0.0, %v1302
    %1304 = vdwg.mxu0
    %v1305 = vadd.f32 %v1213, %v1301
    %v1306 = vadd.f32 %v1214, %v1303
    %s1307 = scalar_lea.vmem [#allocation8], 16
    %1308 = vst [vmem:[%s1307] sm:$0xff] %v1305
    %1309 = vst [vmem:[%s1307 + $0x8] sm:$0xff] %v1306
    // Predicated region
    $region34: #{tpu_custom_call.1} parent=1 // pred_check
      _
    $region35: #{tpu_custom_call.1} parent=1 // pred_check_branch
      %1311 = sbr.rel (0) target = $region37
    $region36: #{tpu_custom_call.1} parent=1 // pred_region
      %s1313 = ssub.s32 512, 512
      %1314 = vsyncadd [#allocation4], %s1313
      %s1315 = sshll.u32 [#allocation8], 4
      %s1316 = int_to_ptr.vmem [resolvable:$true] %s1315
      %1321 = dma.vmem_to_hbm [thread:$0]  %s1316, 512, %s5, [#allocation4], 256, 256, 16
    $region37: #{tpu_custom_call.1} parent=1 // pred_fallthru
      _
    // Predicated region
    $region38: #{tpu_custom_call.1} parent=1 // pred_check
      _
    $region39: #{tpu_custom_call.1} parent=1 // pred_check_branch
      %1323 = sbr.rel (0) target = $region41
    $region40: #{tpu_custom_call.1} parent=1 // pred_region
      %1324 = dma.done [#allocation4], 512
    $region41: #{tpu_custom_call.1} parent=1 // pred_fallthru
      _
    %1325 = vsyncpa [#allocation3], 1
    %1326 = vsyncpa [#allocation6], 1
    %1327 = vsyncpa [#allocation4], 1

</llo_original>
